<compile_context>
chip_gen: v7x
topology: tpu7x:2x2x1
jax: 0.10.0
libtpu: 0.0.40
codegen_flags: <defaults>
</compile_context>

<pallas_src>
import jax
import jax.numpy as jnp
from jax import lax
from jax.experimental import pallas as pl
from jax.experimental.pallas import tpu as pltpu

# ---- synthetic config (mirrors config.* in the PyTorch module) ----
V = 32           # len(config.ws_target)
E = 32           # config.embedding_dim
H = 32           # config.decoder_hidden_size
B = 2            # batch size
T_MAX = 7        # config.target_max_len
STEPS = T_MAX + 1
NUM_LAYERS = 1   # config.decoder_num_layers
PAD = 0          # config.ws_target.PAD
SOS = 1          # config.ws_target.SOS

BP = 8           # batch padded to one sublane tile -> all stores/slices tile-aligned
VP = 128         # vocab padded to one lane tile    -> lane-dense output store
NEG = -1e30      # pad-column logit bias (excluded from softmax mass)


def decoder_kernel(gi_ref, h0_ref, whh_ref, bhhn_ref, wfc_ref, bfc_ref,
                   out_ref, hout_ref):
    gi_all = gi_ref[...]                                             # (STEPS*BP, 3H)
    whh = whh_ref[...]                                               # (H, 3H) fused gates
    bhh_n = bhhn_ref[...]                                            # (BP, H) pre-broadcast

    # ---- serial GRU recurrence (statically unrolled); only h @ W_hh on the chain ----
    h = h0_ref[...]                                                  # (BP, H)
    hs = []
    for t in range(STEPS):
        gi = gi_all[t * BP:(t + 1) * BP, :]                          # (BP, 3H) aligned slice
        gh = jnp.dot(h, whh, preferred_element_type=jnp.float32)     # (BP, 3H)
        r = jax.nn.sigmoid(gi[:, 0:H] + gh[:, 0:H])
        z = jax.nn.sigmoid(gi[:, H:2 * H] + gh[:, H:2 * H])
        n = jnp.tanh(gi[:, 2 * H:3 * H] + r * (gh[:, 2 * H:3 * H] + bhh_n))
        h = (1.0 - z) * n + z * h                                    # (BP, H)
        hs.append(h)                                                 # stays in vregs
    hout_ref[...] = h

    # ---- fc + log_softmax batched over all timesteps, single lane-dense store ----
    h_all = jnp.concatenate(hs, axis=0)                              # (STEPS*BP, H), aligned
    logits = jnp.dot(h_all, wfc_ref[...],
                     preferred_element_type=jnp.float32) + bfc_ref[...]   # (STEPS*BP, VP)
    m = jnp.max(logits, axis=-1, keepdims=True)
    lse = jnp.log(jnp.sum(jnp.exp(logits - m), axis=-1, keepdims=True)) + m
    out_ref[...] = logits - lse


def make_decoder(emb, wih, whh, bih, bhh, wfc, bfc):
    """One-time (model-load-time) parameter folding; returns a jitted forward()."""
    # input-side gate table over the vocab with hidden-side r/z biases folded in
    wih_all = jnp.concatenate([wih[0], wih[1], wih[2]], axis=1)               # (E, 3H)
    gi_bias = jnp.concatenate([bih[0] + bhh[0], bih[1] + bhh[1], bih[2]], axis=1)
    gi_table = emb @ wih_all + gi_bias                                        # (V, 3H)
    whh_all = jnp.concatenate([whh[0], whh[1], whh[2]], axis=1)               # (H, 3H)
    bhh_n_b = jnp.broadcast_to(bhh[2], (BP, H)) + 0.0                         # (BP, H)
    # lane-dense fc: zero-pad weight columns, push pad logits to -inf-ish via bias
    wfc_pad = jnp.zeros((H, VP), jnp.float32).at[:, :V].set(wfc)              # (H, VP)
    bfc_pad = jnp.full((1, VP), NEG, jnp.float32).at[:, :V].set(bfc)          # (1, VP)

    def full(shape):
        return pl.BlockSpec(shape, lambda i: (0,) * len(shape))

    grid_spec = pltpu.PrefetchScalarGridSpec(
        num_scalar_prefetch=0,
        grid=(1,),                       # single invocation; recurrence is in-kernel
        in_specs=[
            full((STEPS * BP, 3 * H)),   # gi_all (gathered in wrapper, time-major)
            full((BP, H)),               # h0 (batch-padded)
            full((H, 3 * H)),            # W_hh, gates fused
            full((BP, H)),               # b_hh (n gate), pre-broadcast
            full((H, VP)),               # fc weight, lane-padded
            full((1, VP)),               # fc bias, lane-padded (-1e30 on pads)
        ],
        out_specs=[
            full((STEPS * BP, VP)),      # log-prob slab, one unmasked dense store
            full((BP, H)),               # final hidden state
        ],
    )
    kernel_call = pl.pallas_call(
        decoder_kernel,
        out_shape=(
            jax.ShapeDtypeStruct((STEPS * BP, VP), jnp.float32),
            jax.ShapeDtypeStruct((BP, H), jnp.float32),
        ),
        grid_spec=grid_spec,
        compiler_params=pltpu.CompilerParams(dimension_semantics=("arbitrary",)),
        # NOTE: for larger batches, add a leading "parallel" grid axis over batch so a
        # second v7x TensorCore gets work; at B=2 one grid point is optimal.
    )

    @jax.jit
    def forward(tokens, h0):
        # tokens: (B, STEPS) teacher-forcing inputs [SOS, target[:, :T]]; h0: (B, H)
        tok_pad = jnp.full((STEPS, BP), PAD, jnp.int32).at[:, :B].set(tokens.T)
        gi_all = gi_table[tok_pad.reshape(STEPS * BP)]               # (STEPS*BP, 3H)
        h0_pad = jnp.zeros((BP, H), jnp.float32).at[:B].set(h0)
        out_pad, h_fin_pad = kernel_call(gi_all, h0_pad, whh_all, bhh_n_b,
                                         wfc_pad, bfc_pad)
        # -> PyTorch layout: decoder_outputs (B, T+1, V), decoder_hidden (1, B, H)
        outs = jnp.transpose(out_pad.reshape(STEPS, BP, VP)[:, :B, :V], (1, 0, 2))
        return outs, h_fin_pad[:B][None]

    return forward


# ---- pure-JAX reference for verification (faithful to PyTorch GRU semantics) ----
def ref_decoder(tokens, h0, emb, wih, whh, bih, bhh, wfc, bfc):
    def step(h, tok_t):
        x = emb[tok_t]                                               # (B, E)
        r = jax.nn.sigmoid(x @ wih[0] + bih[0, 0] + h @ whh[0] + bhh[0, 0])
        z = jax.nn.sigmoid(x @ wih[1] + bih[1, 0] + h @ whh[1] + bhh[1, 0])
        n = jnp.tanh(x @ wih[2] + bih[2, 0] + r * (h @ whh[2] + bhh[2, 0]))
        h_new = (1.0 - z) * n + z * h
        logits = h_new @ wfc + bfc[0]
        return h_new, jax.nn.log_softmax(logits, axis=-1)
    h_fin, outs = lax.scan(step, h0, tokens.T)                       # scan over time
    return jnp.transpose(outs, (1, 0, 2)), h_fin[None]


if __name__ == "__main__":
    key = jax.random.PRNGKey(0)
    ks = jax.random.split(key, 10)

    # Deterministic parameter init (synthetic, matching nn.Module shapes).
    emb = (jax.random.normal(ks[0], (V, E), jnp.float32) * 0.1).at[PAD].set(0.0)
    wih = jax.random.normal(ks[1], (3, E, H), jnp.float32) * 0.1
    whh = jax.random.normal(ks[2], (3, H, H), jnp.float32) * 0.1
    bih = jax.random.normal(ks[3], (3, 1, H), jnp.float32) * 0.1
    bhh = jax.random.normal(ks[4], (3, 1, H), jnp.float32) * 0.1
    wfc = jax.random.normal(ks[5], (H, V), jnp.float32) * 0.1
    bfc = jax.random.normal(ks[6], (1, V), jnp.float32) * 0.1

    # Inputs: target token ids (B, T+1) and encoder_hidden (num_layers, B, H).
    target = jax.random.randint(ks[7], (B, STEPS), 2, V).astype(jnp.int32)
    encoder_hidden = jax.random.normal(ks[8], (NUM_LAYERS, B, H), jnp.float32)

    # Teacher-forcing input sequence: step 0 consumes SOS, step t consumes target[:, t-1].
    tokens = jnp.concatenate(
        [jnp.full((B, 1), SOS, jnp.int32), target[:, :T_MAX]], axis=1
    ).astype(jnp.int32)

    decoder_forward = make_decoder(emb, wih, whh, bih, bhh, wfc, bfc)
    outs, h_fin = decoder_forward(tokens, encoder_hidden[0])
    jax.block_until_ready((outs, h_fin))

    ref_outs, ref_h = ref_decoder(tokens, encoder_hidden[0], emb, wih, whh,
                                  bih, bhh, wfc, bfc)
    assert outs.shape == (B, STEPS, V) and h_fin.shape == (NUM_LAYERS, B, H)
    assert jnp.allclose(outs, ref_outs, atol=1e-4, rtol=1e-4)
    assert jnp.allclose(h_fin, ref_h, atol=1e-4, rtol=1e-4)
    print("KERNEL_OK")
</pallas_src>

<mosaic_0001>
module attributes {stable_mosaic.version = 11 : i64} {
  func.func @decoder_kernel(%arg0: i32, %arg1: memref<64x96xf32, #tpu.memory_space<vmem>>, %arg2: memref<8x32xf32, #tpu.memory_space<vmem>>, %arg3: memref<32x96xf32, #tpu.memory_space<vmem>>, %arg4: memref<8x32xf32, #tpu.memory_space<vmem>>, %arg5: memref<32x128xf32, #tpu.memory_space<vmem>>, %arg6: memref<1x128xf32, #tpu.memory_space<vmem>>, %arg7: memref<64x128xf32, #tpu.memory_space<vmem>>, %arg8: memref<8x32xf32, #tpu.memory_space<vmem>>) attributes {dimension_semantics = [#tpu.dimension_semantics<arbitrary>], iteration_bounds = array<i64: 1>, scalar_prefetch = 0 : i64, scratch_operands = 0 : i64, tpu.core_type = #tpu.core_type<tc>, window_params = [{pipeline_mode = #tpu.pipeline_mode<synchronous>, transform_indices = @transform_0, window_bounds = array<i64: 64, 96>}, {pipeline_mode = #tpu.pipeline_mode<synchronous>, transform_indices = @transform_1, window_bounds = array<i64: 8, 32>}, {pipeline_mode = #tpu.pipeline_mode<synchronous>, transform_indices = @transform_2, window_bounds = array<i64: 32, 96>}, {pipeline_mode = #tpu.pipeline_mode<synchronous>, transform_indices = @transform_3, window_bounds = array<i64: 8, 32>}, {pipeline_mode = #tpu.pipeline_mode<synchronous>, transform_indices = @transform_4, window_bounds = array<i64: 32, 128>}, {pipeline_mode = #tpu.pipeline_mode<synchronous>, transform_indices = @transform_5, window_bounds = array<i64: 1, 128>}, {pipeline_mode = #tpu.pipeline_mode<synchronous>, transform_indices = @transform_6, window_bounds = array<i64: 64, 128>}, {pipeline_mode = #tpu.pipeline_mode<synchronous>, transform_indices = @transform_7, window_bounds = array<i64: 8, 32>}]} {
    %c0 = arith.constant 0 : index
    %c0_0 = arith.constant 0 : index
    %0 = vector.load %arg1[%c0, %c0_0] : memref<64x96xf32, #tpu.memory_space<vmem>>, vector<64x96xf32>
    %c0_1 = arith.constant 0 : index
    %c0_2 = arith.constant 0 : index
    %1 = vector.load %arg3[%c0_1, %c0_2] : memref<32x96xf32, #tpu.memory_space<vmem>>, vector<32x96xf32>
    %c0_3 = arith.constant 0 : index
    %c0_4 = arith.constant 0 : index
    %2 = vector.load %arg4[%c0_3, %c0_4] : memref<8x32xf32, #tpu.memory_space<vmem>>, vector<8x32xf32>
    %c0_5 = arith.constant 0 : index
    %c0_6 = arith.constant 0 : index
    %3 = vector.load %arg2[%c0_5, %c0_6] : memref<8x32xf32, #tpu.memory_space<vmem>>, vector<8x32xf32>
    %4 = vector.extract_strided_slice %0 {offsets = [0, 0], sizes = [8, 96], strides = [1, 1]} : vector<64x96xf32> to vector<8x96xf32>
    %cst = arith.constant dense<0.000000e+00> : vector<8x96xf32>
    %5 = tpu.matmul %3, %1, %cst {dimension_numbers = #tpu.dot_dimension_numbers<[1], [0], [0], [1], [0, 0, 1, 1], [], []>} : vector<8x32xf32>, vector<32x96xf32>, vector<8x96xf32> -> vector<8x96xf32>
    %6 = vector.extract_strided_slice %4 {offsets = [0, 0], sizes = [8, 32], strides = [1, 1]} : vector<8x96xf32> to vector<8x32xf32>
    %7 = vector.extract_strided_slice %5 {offsets = [0, 0], sizes = [8, 32], strides = [1, 1]} : vector<8x96xf32> to vector<8x32xf32>
    %8 = arith.addf %6, %7 : vector<8x32xf32>
    %9 = arith.negf %8 : vector<8x32xf32>
    %10 = math.exp %9 : vector<8x32xf32>
    %cst_7 = arith.constant 1.000000e+00 : f32
    %11 = vector.broadcast %cst_7 : f32 to vector<8x32xf32>
    %12 = arith.addf %11, %10 : vector<8x32xf32>
    %13 = arith.divf %11, %12 : vector<8x32xf32>
    %14 = vector.extract_strided_slice %4 {offsets = [0, 32], sizes = [8, 32], strides = [1, 1]} : vector<8x96xf32> to vector<8x32xf32>
    %15 = vector.extract_strided_slice %5 {offsets = [0, 32], sizes = [8, 32], strides = [1, 1]} : vector<8x96xf32> to vector<8x32xf32>
    %16 = arith.addf %14, %15 : vector<8x32xf32>
    %17 = arith.negf %16 : vector<8x32xf32>
    %18 = math.exp %17 : vector<8x32xf32>
    %cst_8 = arith.constant 1.000000e+00 : f32
    %19 = vector.broadcast %cst_8 : f32 to vector<8x32xf32>
    %20 = arith.addf %19, %18 : vector<8x32xf32>
    %21 = arith.divf %19, %20 : vector<8x32xf32>
    %22 = vector.extract_strided_slice %4 {offsets = [0, 64], sizes = [8, 32], strides = [1, 1]} : vector<8x96xf32> to vector<8x32xf32>
    %23 = vector.extract_strided_slice %5 {offsets = [0, 64], sizes = [8, 32], strides = [1, 1]} : vector<8x96xf32> to vector<8x32xf32>
    %24 = arith.addf %23, %2 : vector<8x32xf32>
    %25 = arith.mulf %13, %24 : vector<8x32xf32>
    %26 = arith.addf %22, %25 : vector<8x32xf32>
    %27 = math.tanh %26 : vector<8x32xf32>
    %cst_9 = arith.constant 1.000000e+00 : f32
    %28 = vector.broadcast %cst_9 : f32 to vector<8x32xf32>
    %29 = arith.subf %28, %21 : vector<8x32xf32>
    %30 = arith.mulf %29, %27 : vector<8x32xf32>
    %31 = arith.mulf %21, %3 : vector<8x32xf32>
    %32 = arith.addf %30, %31 : vector<8x32xf32>
    %33 = vector.extract_strided_slice %0 {offsets = [8, 0], sizes = [8, 96], strides = [1, 1]} : vector<64x96xf32> to vector<8x96xf32>
    %cst_10 = arith.constant dense<0.000000e+00> : vector<8x96xf32>
    %34 = tpu.matmul %32, %1, %cst_10 {dimension_numbers = #tpu.dot_dimension_numbers<[1], [0], [0], [1], [0, 0, 1, 1], [], []>} : vector<8x32xf32>, vector<32x96xf32>, vector<8x96xf32> -> vector<8x96xf32>
    %35 = vector.extract_strided_slice %33 {offsets = [0, 0], sizes = [8, 32], strides = [1, 1]} : vector<8x96xf32> to vector<8x32xf32>
    %36 = vector.extract_strided_slice %34 {offsets = [0, 0], sizes = [8, 32], strides = [1, 1]} : vector<8x96xf32> to vector<8x32xf32>
    %37 = arith.addf %35, %36 : vector<8x32xf32>
    %38 = arith.negf %37 : vector<8x32xf32>
    %39 = math.exp %38 : vector<8x32xf32>
    %cst_11 = arith.constant 1.000000e+00 : f32
    %40 = vector.broadcast %cst_11 : f32 to vector<8x32xf32>
    %41 = arith.addf %40, %39 : vector<8x32xf32>
    %42 = arith.divf %40, %41 : vector<8x32xf32>
    %43 = vector.extract_strided_slice %33 {offsets = [0, 32], sizes = [8, 32], strides = [1, 1]} : vector<8x96xf32> to vector<8x32xf32>
    %44 = vector.extract_strided_slice %34 {offsets = [0, 32], sizes = [8, 32], strides = [1, 1]} : vector<8x96xf32> to vector<8x32xf32>
    %45 = arith.addf %43, %44 : vector<8x32xf32>
    %46 = arith.negf %45 : vector<8x32xf32>
    %47 = math.exp %46 : vector<8x32xf32>
    %cst_12 = arith.constant 1.000000e+00 : f32
    %48 = vector.broadcast %cst_12 : f32 to vector<8x32xf32>
    %49 = arith.addf %48, %47 : vector<8x32xf32>
    %50 = arith.divf %48, %49 : vector<8x32xf32>
    %51 = vector.extract_strided_slice %33 {offsets = [0, 64], sizes = [8, 32], strides = [1, 1]} : vector<8x96xf32> to vector<8x32xf32>
    %52 = vector.extract_strided_slice %34 {offsets = [0, 64], sizes = [8, 32], strides = [1, 1]} : vector<8x96xf32> to vector<8x32xf32>
    %53 = arith.addf %52, %2 : vector<8x32xf32>
    %54 = arith.mulf %42, %53 : vector<8x32xf32>
    %55 = arith.addf %51, %54 : vector<8x32xf32>
    %56 = math.tanh %55 : vector<8x32xf32>
    %cst_13 = arith.constant 1.000000e+00 : f32
    %57 = vector.broadcast %cst_13 : f32 to vector<8x32xf32>
    %58 = arith.subf %57, %50 : vector<8x32xf32>
    %59 = arith.mulf %58, %56 : vector<8x32xf32>
    %60 = arith.mulf %50, %32 : vector<8x32xf32>
    %61 = arith.addf %59, %60 : vector<8x32xf32>
    %62 = vector.extract_strided_slice %0 {offsets = [16, 0], sizes = [8, 96], strides = [1, 1]} : vector<64x96xf32> to vector<8x96xf32>
    %cst_14 = arith.constant dense<0.000000e+00> : vector<8x96xf32>
    %63 = tpu.matmul %61, %1, %cst_14 {dimension_numbers = #tpu.dot_dimension_numbers<[1], [0], [0], [1], [0, 0, 1, 1], [], []>} : vector<8x32xf32>, vector<32x96xf32>, vector<8x96xf32> -> vector<8x96xf32>
    %64 = vector.extract_strided_slice %62 {offsets = [0, 0], sizes = [8, 32], strides = [1, 1]} : vector<8x96xf32> to vector<8x32xf32>
    %65 = vector.extract_strided_slice %63 {offsets = [0, 0], sizes = [8, 32], strides = [1, 1]} : vector<8x96xf32> to vector<8x32xf32>
    %66 = arith.addf %64, %65 : vector<8x32xf32>
    %67 = arith.negf %66 : vector<8x32xf32>
    %68 = math.exp %67 : vector<8x32xf32>
    %cst_15 = arith.constant 1.000000e+00 : f32
    %69 = vector.broadcast %cst_15 : f32 to vector<8x32xf32>
    %70 = arith.addf %69, %68 : vector<8x32xf32>
    %71 = arith.divf %69, %70 : vector<8x32xf32>
    %72 = vector.extract_strided_slice %62 {offsets = [0, 32], sizes = [8, 32], strides = [1, 1]} : vector<8x96xf32> to vector<8x32xf32>
    %73 = vector.extract_strided_slice %63 {offsets = [0, 32], sizes = [8, 32], strides = [1, 1]} : vector<8x96xf32> to vector<8x32xf32>
    %74 = arith.addf %72, %73 : vector<8x32xf32>
    %75 = arith.negf %74 : vector<8x32xf32>
    %76 = math.exp %75 : vector<8x32xf32>
    %cst_16 = arith.constant 1.000000e+00 : f32
    %77 = vector.broadcast %cst_16 : f32 to vector<8x32xf32>
    %78 = arith.addf %77, %76 : vector<8x32xf32>
    %79 = arith.divf %77, %78 : vector<8x32xf32>
    %80 = vector.extract_strided_slice %62 {offsets = [0, 64], sizes = [8, 32], strides = [1, 1]} : vector<8x96xf32> to vector<8x32xf32>
    %81 = vector.extract_strided_slice %63 {offsets = [0, 64], sizes = [8, 32], strides = [1, 1]} : vector<8x96xf32> to vector<8x32xf32>
    %82 = arith.addf %81, %2 : vector<8x32xf32>
    %83 = arith.mulf %71, %82 : vector<8x32xf32>
    %84 = arith.addf %80, %83 : vector<8x32xf32>
    %85 = math.tanh %84 : vector<8x32xf32>
    %cst_17 = arith.constant 1.000000e+00 : f32
    %86 = vector.broadcast %cst_17 : f32 to vector<8x32xf32>
    %87 = arith.subf %86, %79 : vector<8x32xf32>
    %88 = arith.mulf %87, %85 : vector<8x32xf32>
    %89 = arith.mulf %79, %61 : vector<8x32xf32>
    %90 = arith.addf %88, %89 : vector<8x32xf32>
    %91 = vector.extract_strided_slice %0 {offsets = [24, 0], sizes = [8, 96], strides = [1, 1]} : vector<64x96xf32> to vector<8x96xf32>
    %cst_18 = arith.constant dense<0.000000e+00> : vector<8x96xf32>
    %92 = tpu.matmul %90, %1, %cst_18 {dimension_numbers = #tpu.dot_dimension_numbers<[1], [0], [0], [1], [0, 0, 1, 1], [], []>} : vector<8x32xf32>, vector<32x96xf32>, vector<8x96xf32> -> vector<8x96xf32>
    %93 = vector.extract_strided_slice %91 {offsets = [0, 0], sizes = [8, 32], strides = [1, 1]} : vector<8x96xf32> to vector<8x32xf32>
    %94 = vector.extract_strided_slice %92 {offsets = [0, 0], sizes = [8, 32], strides = [1, 1]} : vector<8x96xf32> to vector<8x32xf32>
    %95 = arith.addf %93, %94 : vector<8x32xf32>
    %96 = arith.negf %95 : vector<8x32xf32>
    %97 = math.exp %96 : vector<8x32xf32>
    %cst_19 = arith.constant 1.000000e+00 : f32
    %98 = vector.broadcast %cst_19 : f32 to vector<8x32xf32>
    %99 = arith.addf %98, %97 : vector<8x32xf32>
    %100 = arith.divf %98, %99 : vector<8x32xf32>
    %101 = vector.extract_strided_slice %91 {offsets = [0, 32], sizes = [8, 32], strides = [1, 1]} : vector<8x96xf32> to vector<8x32xf32>
    %102 = vector.extract_strided_slice %92 {offsets = [0, 32], sizes = [8, 32], strides = [1, 1]} : vector<8x96xf32> to vector<8x32xf32>
    %103 = arith.addf %101, %102 : vector<8x32xf32>
    %104 = arith.negf %103 : vector<8x32xf32>
    %105 = math.exp %104 : vector<8x32xf32>
    %cst_20 = arith.constant 1.000000e+00 : f32
    %106 = vector.broadcast %cst_20 : f32 to vector<8x32xf32>
    %107 = arith.addf %106, %105 : vector<8x32xf32>
    %108 = arith.divf %106, %107 : vector<8x32xf32>
    %109 = vector.extract_strided_slice %91 {offsets = [0, 64], sizes = [8, 32], strides = [1, 1]} : vector<8x96xf32> to vector<8x32xf32>
    %110 = vector.extract_strided_slice %92 {offsets = [0, 64], sizes = [8, 32], strides = [1, 1]} : vector<8x96xf32> to vector<8x32xf32>
    %111 = arith.addf %110, %2 : vector<8x32xf32>
    %112 = arith.mulf %100, %111 : vector<8x32xf32>
    %113 = arith.addf %109, %112 : vector<8x32xf32>
    %114 = math.tanh %113 : vector<8x32xf32>
    %cst_21 = arith.constant 1.000000e+00 : f32
    %115 = vector.broadcast %cst_21 : f32 to vector<8x32xf32>
    %116 = arith.subf %115, %108 : vector<8x32xf32>
    %117 = arith.mulf %116, %114 : vector<8x32xf32>
    %118 = arith.mulf %108, %90 : vector<8x32xf32>
    %119 = arith.addf %117, %118 : vector<8x32xf32>
    %120 = vector.extract_strided_slice %0 {offsets = [32, 0], sizes = [8, 96], strides = [1, 1]} : vector<64x96xf32> to vector<8x96xf32>
    %cst_22 = arith.constant dense<0.000000e+00> : vector<8x96xf32>
    %121 = tpu.matmul %119, %1, %cst_22 {dimension_numbers = #tpu.dot_dimension_numbers<[1], [0], [0], [1], [0, 0, 1, 1], [], []>} : vector<8x32xf32>, vector<32x96xf32>, vector<8x96xf32> -> vector<8x96xf32>
    %122 = vector.extract_strided_slice %120 {offsets = [0, 0], sizes = [8, 32], strides = [1, 1]} : vector<8x96xf32> to vector<8x32xf32>
    %123 = vector.extract_strided_slice %121 {offsets = [0, 0], sizes = [8, 32], strides = [1, 1]} : vector<8x96xf32> to vector<8x32xf32>
    %124 = arith.addf %122, %123 : vector<8x32xf32>
    %125 = arith.negf %124 : vector<8x32xf32>
    %126 = math.exp %125 : vector<8x32xf32>
    %cst_23 = arith.constant 1.000000e+00 : f32
    %127 = vector.broadcast %cst_23 : f32 to vector<8x32xf32>
    %128 = arith.addf %127, %126 : vector<8x32xf32>
    %129 = arith.divf %127, %128 : vector<8x32xf32>
    %130 = vector.extract_strided_slice %120 {offsets = [0, 32], sizes = [8, 32], strides = [1, 1]} : vector<8x96xf32> to vector<8x32xf32>
    %131 = vector.extract_strided_slice %121 {offsets = [0, 32], sizes = [8, 32], strides = [1, 1]} : vector<8x96xf32> to vector<8x32xf32>
    %132 = arith.addf %130, %131 : vector<8x32xf32>
    %133 = arith.negf %132 : vector<8x32xf32>
    %134 = math.exp %133 : vector<8x32xf32>
    %cst_24 = arith.constant 1.000000e+00 : f32
    %135 = vector.broadcast %cst_24 : f32 to vector<8x32xf32>
    %136 = arith.addf %135, %134 : vector<8x32xf32>
    %137 = arith.divf %135, %136 : vector<8x32xf32>
    %138 = vector.extract_strided_slice %120 {offsets = [0, 64], sizes = [8, 32], strides = [1, 1]} : vector<8x96xf32> to vector<8x32xf32>
    %139 = vector.extract_strided_slice %121 {offsets = [0, 64], sizes = [8, 32], strides = [1, 1]} : vector<8x96xf32> to vector<8x32xf32>
    %140 = arith.addf %139, %2 : vector<8x32xf32>
    %141 = arith.mulf %129, %140 : vector<8x32xf32>
    %142 = arith.addf %138, %141 : vector<8x32xf32>
    %143 = math.tanh %142 : vector<8x32xf32>
    %cst_25 = arith.constant 1.000000e+00 : f32
    %144 = vector.broadcast %cst_25 : f32 to vector<8x32xf32>
    %145 = arith.subf %144, %137 : vector<8x32xf32>
    %146 = arith.mulf %145, %143 : vector<8x32xf32>
    %147 = arith.mulf %137, %119 : vector<8x32xf32>
    %148 = arith.addf %146, %147 : vector<8x32xf32>
    %149 = vector.extract_strided_slice %0 {offsets = [40, 0], sizes = [8, 96], strides = [1, 1]} : vector<64x96xf32> to vector<8x96xf32>
    %cst_26 = arith.constant dense<0.000000e+00> : vector<8x96xf32>
    %150 = tpu.matmul %148, %1, %cst_26 {dimension_numbers = #tpu.dot_dimension_numbers<[1], [0], [0], [1], [0, 0, 1, 1], [], []>} : vector<8x32xf32>, vector<32x96xf32>, vector<8x96xf32> -> vector<8x96xf32>
    %151 = vector.extract_strided_slice %149 {offsets = [0, 0], sizes = [8, 32], strides = [1, 1]} : vector<8x96xf32> to vector<8x32xf32>
    %152 = vector.extract_strided_slice %150 {offsets = [0, 0], sizes = [8, 32], strides = [1, 1]} : vector<8x96xf32> to vector<8x32xf32>
    %153 = arith.addf %151, %152 : vector<8x32xf32>
    %154 = arith.negf %153 : vector<8x32xf32>
    %155 = math.exp %154 : vector<8x32xf32>
    %cst_27 = arith.constant 1.000000e+00 : f32
    %156 = vector.broadcast %cst_27 : f32 to vector<8x32xf32>
    %157 = arith.addf %156, %155 : vector<8x32xf32>
    %158 = arith.divf %156, %157 : vector<8x32xf32>
    %159 = vector.extract_strided_slice %149 {offsets = [0, 32], sizes = [8, 32], strides = [1, 1]} : vector<8x96xf32> to vector<8x32xf32>
    %160 = vector.extract_strided_slice %150 {offsets = [0, 32], sizes = [8, 32], strides = [1, 1]} : vector<8x96xf32> to vector<8x32xf32>
    %161 = arith.addf %159, %160 : vector<8x32xf32>
    %162 = arith.negf %161 : vector<8x32xf32>
    %163 = math.exp %162 : vector<8x32xf32>
    %cst_28 = arith.constant 1.000000e+00 : f32
    %164 = vector.broadcast %cst_28 : f32 to vector<8x32xf32>
    %165 = arith.addf %164, %163 : vector<8x32xf32>
    %166 = arith.divf %164, %165 : vector<8x32xf32>
    %167 = vector.extract_strided_slice %149 {offsets = [0, 64], sizes = [8, 32], strides = [1, 1]} : vector<8x96xf32> to vector<8x32xf32>
    %168 = vector.extract_strided_slice %150 {offsets = [0, 64], sizes = [8, 32], strides = [1, 1]} : vector<8x96xf32> to vector<8x32xf32>
    %169 = arith.addf %168, %2 : vector<8x32xf32>
    %170 = arith.mulf %158, %169 : vector<8x32xf32>
    %171 = arith.addf %167, %170 : vector<8x32xf32>
    %172 = math.tanh %171 : vector<8x32xf32>
    %cst_29 = arith.constant 1.000000e+00 : f32
    %173 = vector.broadcast %cst_29 : f32 to vector<8x32xf32>
    %174 = arith.subf %173, %166 : vector<8x32xf32>
    %175 = arith.mulf %174, %172 : vector<8x32xf32>
    %176 = arith.mulf %166, %148 : vector<8x32xf32>
    %177 = arith.addf %175, %176 : vector<8x32xf32>
    %178 = vector.extract_strided_slice %0 {offsets = [48, 0], sizes = [8, 96], strides = [1, 1]} : vector<64x96xf32> to vector<8x96xf32>
    %cst_30 = arith.constant dense<0.000000e+00> : vector<8x96xf32>
    %179 = tpu.matmul %177, %1, %cst_30 {dimension_numbers = #tpu.dot_dimension_numbers<[1], [0], [0], [1], [0, 0, 1, 1], [], []>} : vector<8x32xf32>, vector<32x96xf32>, vector<8x96xf32> -> vector<8x96xf32>
    %180 = vector.extract_strided_slice %178 {offsets = [0, 0], sizes = [8, 32], strides = [1, 1]} : vector<8x96xf32> to vector<8x32xf32>
    %181 = vector.extract_strided_slice %179 {offsets = [0, 0], sizes = [8, 32], strides = [1, 1]} : vector<8x96xf32> to vector<8x32xf32>
    %182 = arith.addf %180, %181 : vector<8x32xf32>
    %183 = arith.negf %182 : vector<8x32xf32>
    %184 = math.exp %183 : vector<8x32xf32>
    %cst_31 = arith.constant 1.000000e+00 : f32
    %185 = vector.broadcast %cst_31 : f32 to vector<8x32xf32>
    %186 = arith.addf %185, %184 : vector<8x32xf32>
    %187 = arith.divf %185, %186 : vector<8x32xf32>
    %188 = vector.extract_strided_slice %178 {offsets = [0, 32], sizes = [8, 32], strides = [1, 1]} : vector<8x96xf32> to vector<8x32xf32>
    %189 = vector.extract_strided_slice %179 {offsets = [0, 32], sizes = [8, 32], strides = [1, 1]} : vector<8x96xf32> to vector<8x32xf32>
    %190 = arith.addf %188, %189 : vector<8x32xf32>
    %191 = arith.negf %190 : vector<8x32xf32>
    %192 = math.exp %191 : vector<8x32xf32>
    %cst_32 = arith.constant 1.000000e+00 : f32
    %193 = vector.broadcast %cst_32 : f32 to vector<8x32xf32>
    %194 = arith.addf %193, %192 : vector<8x32xf32>
    %195 = arith.divf %193, %194 : vector<8x32xf32>
    %196 = vector.extract_strided_slice %178 {offsets = [0, 64], sizes = [8, 32], strides = [1, 1]} : vector<8x96xf32> to vector<8x32xf32>
    %197 = vector.extract_strided_slice %179 {offsets = [0, 64], sizes = [8, 32], strides = [1, 1]} : vector<8x96xf32> to vector<8x32xf32>
    %198 = arith.addf %197, %2 : vector<8x32xf32>
    %199 = arith.mulf %187, %198 : vector<8x32xf32>
    %200 = arith.addf %196, %199 : vector<8x32xf32>
    %201 = math.tanh %200 : vector<8x32xf32>
    %cst_33 = arith.constant 1.000000e+00 : f32
    %202 = vector.broadcast %cst_33 : f32 to vector<8x32xf32>
    %203 = arith.subf %202, %195 : vector<8x32xf32>
    %204 = arith.mulf %203, %201 : vector<8x32xf32>
    %205 = arith.mulf %195, %177 : vector<8x32xf32>
    %206 = arith.addf %204, %205 : vector<8x32xf32>
    %207 = vector.extract_strided_slice %0 {offsets = [56, 0], sizes = [8, 96], strides = [1, 1]} : vector<64x96xf32> to vector<8x96xf32>
    %cst_34 = arith.constant dense<0.000000e+00> : vector<8x96xf32>
    %208 = tpu.matmul %206, %1, %cst_34 {dimension_numbers = #tpu.dot_dimension_numbers<[1], [0], [0], [1], [0, 0, 1, 1], [], []>} : vector<8x32xf32>, vector<32x96xf32>, vector<8x96xf32> -> vector<8x96xf32>
    %209 = vector.extract_strided_slice %207 {offsets = [0, 0], sizes = [8, 32], strides = [1, 1]} : vector<8x96xf32> to vector<8x32xf32>
    %210 = vector.extract_strided_slice %208 {offsets = [0, 0], sizes = [8, 32], strides = [1, 1]} : vector<8x96xf32> to vector<8x32xf32>
    %211 = arith.addf %209, %210 : vector<8x32xf32>
    %212 = arith.negf %211 : vector<8x32xf32>
    %213 = math.exp %212 : vector<8x32xf32>
    %cst_35 = arith.constant 1.000000e+00 : f32
    %214 = vector.broadcast %cst_35 : f32 to vector<8x32xf32>
    %215 = arith.addf %214, %213 : vector<8x32xf32>
    %216 = arith.divf %214, %215 : vector<8x32xf32>
    %217 = vector.extract_strided_slice %207 {offsets = [0, 32], sizes = [8, 32], strides = [1, 1]} : vector<8x96xf32> to vector<8x32xf32>
    %218 = vector.extract_strided_slice %208 {offsets = [0, 32], sizes = [8, 32], strides = [1, 1]} : vector<8x96xf32> to vector<8x32xf32>
    %219 = arith.addf %217, %218 : vector<8x32xf32>
    %220 = arith.negf %219 : vector<8x32xf32>
    %221 = math.exp %220 : vector<8x32xf32>
    %cst_36 = arith.constant 1.000000e+00 : f32
    %222 = vector.broadcast %cst_36 : f32 to vector<8x32xf32>
    %223 = arith.addf %222, %221 : vector<8x32xf32>
    %224 = arith.divf %222, %223 : vector<8x32xf32>
    %225 = vector.extract_strided_slice %207 {offsets = [0, 64], sizes = [8, 32], strides = [1, 1]} : vector<8x96xf32> to vector<8x32xf32>
    %226 = vector.extract_strided_slice %208 {offsets = [0, 64], sizes = [8, 32], strides = [1, 1]} : vector<8x96xf32> to vector<8x32xf32>
    %227 = arith.addf %226, %2 : vector<8x32xf32>
    %228 = arith.mulf %216, %227 : vector<8x32xf32>
    %229 = arith.addf %225, %228 : vector<8x32xf32>
    %230 = math.tanh %229 : vector<8x32xf32>
    %cst_37 = arith.constant 1.000000e+00 : f32
    %231 = vector.broadcast %cst_37 : f32 to vector<8x32xf32>
    %232 = arith.subf %231, %224 : vector<8x32xf32>
    %233 = arith.mulf %232, %230 : vector<8x32xf32>
    %234 = arith.mulf %224, %206 : vector<8x32xf32>
    %235 = arith.addf %233, %234 : vector<8x32xf32>
    %c0_38 = arith.constant 0 : index
    %c0_39 = arith.constant 0 : index
    %236 = vector.load %arg8[%c0_38, %c0_39] : memref<8x32xf32, #tpu.memory_space<vmem>>, vector<8x32xf32>
    tpu.vector_store %arg8[%c0_38, %c0_39], %235 {strides = array<i32>} : memref<8x32xf32, #tpu.memory_space<vmem>>, vector<8x32xf32>,
    %237 = tpu.concatenate %32, %61, %90, %119, %148, %177, %206, %235 in 0 : vector<8x32xf32>, vector<8x32xf32>, vector<8x32xf32>, vector<8x32xf32>, vector<8x32xf32>, vector<8x32xf32>, vector<8x32xf32>, vector<8x32xf32> -> vector<64x32xf32>
    %c0_40 = arith.constant 0 : index
    %c0_41 = arith.constant 0 : index
    %238 = vector.load %arg5[%c0_40, %c0_41] : memref<32x128xf32, #tpu.memory_space<vmem>>, vector<32x128xf32>
    %cst_42 = arith.constant dense<0.000000e+00> : vector<64x128xf32>
    %239 = tpu.matmul %237, %238, %cst_42 {dimension_numbers = #tpu.dot_dimension_numbers<[1], [0], [0], [1], [0, 0, 1, 1], [], []>} : vector<64x32xf32>, vector<32x128xf32>, vector<64x128xf32> -> vector<64x128xf32>
    %c0_43 = arith.constant 0 : index
    %c0_44 = arith.constant 0 : index
    %240 = vector.load %arg6[%c0_43, %c0_44] : memref<1x128xf32, #tpu.memory_space<vmem>>, vector<1x128xf32>
    %241 = vector.broadcast %240 : vector<1x128xf32> to vector<64x128xf32>
    %242 = arith.addf %239, %241 : vector<64x128xf32>
    %cst_45 = arith.constant dense<0xFF800000> : vector<64xf32>
    %243 = vector.multi_reduction <maximumf>, %242, %cst_45 [1] : vector<64x128xf32> to vector<64xf32>
    %244 = vector.shape_cast %243 : vector<64xf32> to vector<64x1xf32>
    %245 = vector.broadcast %244 : vector<64x1xf32> to vector<64x128xf32>
    %246 = arith.subf %242, %245 : vector<64x128xf32>
    %247 = math.exp %246 : vector<64x128xf32>
    %cst_46 = arith.constant dense<0.000000e+00> : vector<64xf32>
    %248 = vector.multi_reduction <add>, %247, %cst_46 [1] : vector<64x128xf32> to vector<64xf32>
    %249 = vector.shape_cast %248 : vector<64xf32> to vector<64x1xf32>
    %250 = math.log %249 : vector<64x1xf32>
    %251 = arith.addf %250, %244 : vector<64x1xf32>
    %252 = vector.broadcast %251 : vector<64x1xf32> to vector<64x128xf32>
    %253 = arith.subf %242, %252 : vector<64x128xf32>
    %c0_47 = arith.constant 0 : index
    %c0_48 = arith.constant 0 : index
    %254 = vector.load %arg7[%c0_47, %c0_48] : memref<64x128xf32, #tpu.memory_space<vmem>>, vector<64x128xf32>
    tpu.vector_store %arg7[%c0_47, %c0_48], %253 {strides = array<i32>} : memref<64x128xf32, #tpu.memory_space<vmem>>, vector<64x128xf32>,
    return
  }
  func.func @transform_0(%arg0: i32) -> (i32, i32) {
    %c0_i32 = arith.constant 0 : i32
    %c0_i32_0 = arith.constant 0 : i32
    %c0_i32_1 = arith.constant 0 : i32
    return %c0_i32, %c0_i32_0 : i32, i32
  }
  func.func @transform_1(%arg0: i32) -> (i32, i32) {
    %c0_i32 = arith.constant 0 : i32
    %c0_i32_0 = arith.constant 0 : i32
    %c0_i32_1 = arith.constant 0 : i32
    return %c0_i32, %c0_i32_0 : i32, i32
  }
  func.func @transform_2(%arg0: i32) -> (i32, i32) {
    %c0_i32 = arith.constant 0 : i32
    %c0_i32_0 = arith.constant 0 : i32
    %c0_i32_1 = arith.constant 0 : i32
    return %c0_i32, %c0_i32_0 : i32, i32
  }
  func.func @transform_3(%arg0: i32) -> (i32, i32) {
    %c0_i32 = arith.constant 0 : i32
    %c0_i32_0 = arith.constant 0 : i32
    %c0_i32_1 = arith.constant 0 : i32
    return %c0_i32, %c0_i32_0 : i32, i32
  }
  func.func @transform_4(%arg0: i32) -> (i32, i32) {
    %c0_i32 = arith.constant 0 : i32
    %c0_i32_0 = arith.constant 0 : i32
    %c0_i32_1 = arith.constant 0 : i32
    return %c0_i32, %c0_i32_0 : i32, i32
  }
  func.func @transform_5(%arg0: i32) -> (i32, i32) {
    %c0_i32 = arith.constant 0 : i32
    %c0_i32_0 = arith.constant 0 : i32
    %c0_i32_1 = arith.constant 0 : i32
    return %c0_i32, %c0_i32_0 : i32, i32
  }
  func.func @transform_6(%arg0: i32) -> (i32, i32) {
    %c0_i32 = arith.constant 0 : i32
    %c0_i32_0 = arith.constant 0 : i32
    %c0_i32_1 = arith.constant 0 : i32
    return %c0_i32, %c0_i32_0 : i32, i32
  }
  func.func @transform_7(%arg0: i32) -> (i32, i32) {
    %c0_i32 = arith.constant 0 : i32
    %c0_i32_0 = arith.constant 0 : i32
    %c0_i32_1 = arith.constant 0 : i32
    return %c0_i32, %c0_i32_0 : i32, i32
  }
}

</mosaic_0001>

<llo_original>
// kernel: forward.1
$region0: #{forward.1}
  #allocation0 [shape = 'u32[]', space=smem, size = 0x4, offset = 0x4, fixed_abs, tag = 'smem constant byte address 0x4 - core index']
  #allocation1 [shape = 'u32[144,128]{1,0:T(1,128)}', space=vmem, size = 0x12000, scoped, tag = 'internal scratch']
  %s0 = inlined_call_operand.vmem [shape: f32[64,96], index: 0, kind: input, shape index: {}]
  %s1 = inlined_call_operand.vmem [shape: f32[8,32], index: 1, kind: input, shape index: {}]
  %s2 = inlined_call_operand.vmem [shape: f32[32,96], index: 2, kind: input, shape index: {}]
  %s3 = inlined_call_operand.vmem [shape: f32[8,32], index: 3, kind: input, shape index: {}]
  %s4 = inlined_call_operand.vmem [shape: f32[32,128], index: 4, kind: input, shape index: {}]
  %s5 = inlined_call_operand.vmem [shape: f32[1,128], index: 5, kind: input, shape index: {}]
  %s6 = inlined_call_operand.vmem [shape: f32[64,128], index: 6, kind: output, shape index: {0}]
  %s7 = inlined_call_operand.vmem [shape: f32[8,32], index: 7, kind: output, shape index: {1}]
  %8 = xla_tuple %s6, %s7
  %s9 = sld [smem:[#allocation0]]
  $region42: #{forward.1} parent=0
    _
  %s11 = ssub.s32 1, %s9
  %s12 = scalar_select 0, %s11, %s9
  // Predicated region
  $region2: #{forward.1} parent=0 // pred_check
    _
  $region3: #{forward.1} parent=0 // pred_check_branch
    %14 = sbr.rel (0) target = $region5
  $region4: #{forward.1} parent=0 // pred_region
    _
  $region5: #{forward.1} parent=0 // pred_fallthru
    _
  // Predicated region
  $region6: #{forward.1} parent=0 // pred_check
    _
  $region7: #{forward.1} parent=0 // pred_check_branch
    %16 = sbr.rel (0) target = $region9
  $region8: #{forward.1} parent=0 // pred_region
    _
  $region9: #{forward.1} parent=0 // pred_fallthru
    _
  // Predicated region
  $region10: #{forward.1} parent=0 // pred_check
    _
  $region11: #{forward.1} parent=0 // pred_check_branch
    %18 = sbr.rel (0) target = $region13
  $region12: #{forward.1} parent=0 // pred_region
    _
  $region13: #{forward.1} parent=0 // pred_fallthru
    _
  // Predicated region
  $region14: #{forward.1} parent=0 // pred_check
    _
  $region15: #{forward.1} parent=0 // pred_check_branch
    %20 = sbr.rel (0) target = $region17
  $region16: #{forward.1} parent=0 // pred_region
    _
  $region17: #{forward.1} parent=0 // pred_fallthru
    _
  // Predicated region
  $region18: #{forward.1} parent=0 // pred_check
    _
  $region19: #{forward.1} parent=0 // pred_check_branch
    %22 = sbr.rel (0) target = $region21
  $region20: #{forward.1} parent=0 // pred_region
    _
  $region21: #{forward.1} parent=0 // pred_fallthru
    _
  // Predicated region
  $region22: #{forward.1} parent=0 // pred_check
    _
  $region23: #{forward.1} parent=0 // pred_check_branch
    %24 = sbr.rel (0) target = $region25
  $region24: #{forward.1} parent=0 // pred_region
    _
  $region25: #{forward.1} parent=0 // pred_fallthru
    _
  %v25 = vld [vmem:[%s0] sm:$0xff]
  %v26 = vld [vmem:[%s0 + $0x8] sm:$0xff]
  %v27 = vld [vmem:[%s0 + $0x10] sm:$0xff]
  %v28 = vld [vmem:[%s0 + $0x18] sm:$0xff]
  %v29 = vld [vmem:[%s0 + $0x20] sm:$0xff]
  %v30 = vld [vmem:[%s0 + $0x28] sm:$0xff]
  %v31 = vld [vmem:[%s0 + $0x30] sm:$0xff]
  %v32 = vld [vmem:[%s0 + $0x38] sm:$0xff]
  %v33 = vld [vmem:[%s2] sm:$0xff]
  %v34 = vld [vmem:[%s2 + $0x8] sm:$0xff]
  %v35 = vld [vmem:[%s2 + $0x10] sm:$0xff]
  %v36 = vld [vmem:[%s2 + $0x18] sm:$0xff]
  %v37 = vld [vmem:[%s3] sm:$0xff]
  %v38 = vld [vmem:[%s1] sm:$0xff]
  %vm39 = vcmask 261120
  %v41 = vsel %vm39, %v38, 0
  %43 = vmatprep.subr.mxu0 0.0
  %44 = vmatpush1.msra.mxu0 %v33
  %45 = vmatprep.subr.mxu0 0.0
  %46 = vmatpush1.msra.mxu0 %v34
  %47 = vmatprep.subr.mxu0 0.0
  %48 = vmatpush1.msra.mxu0 %v35
  %49 = vmatprep.subr.mxu0 0.0
  %50 = vmatpush1.msra.mxu0 %v36
  %51 = vmatprep.subr.mxu0 0.0
  %52 = vmatpush1.msra.mxu0 0.0
  %53 = vmatprep.subr.mxu0 0.0
  %54 = vmatpush1.msra.mxu0 0.0
  %55 = vmatprep.subr.mxu0 0.0
  %56 = vmatpush1.msra.mxu0 0.0
  %57 = vmatprep.subr.mxu0 0.0
  %58 = vmatpush1.msra.mxu0 0.0
  %59 = vmatprep.subr.mxu0 0.0
  %60 = vmatpush1.msra.mxu0 0.0
  %61 = vmatprep.subr.mxu0 0.0
  %62 = vmatpush1.msra.mxu0 0.0
  %63 = vmatprep.subr.mxu0 0.0
  %64 = vmatpush1.msra.mxu0 0.0
  %65 = vmatprep.subr.mxu0 0.0
  %66 = vmatpush1.msra.mxu0 0.0
  %67 = vmatprep.subr.mxu0 0.0
  %68 = vmatpush1.msra.mxu0 0.0
  %69 = vmatprep.subr.mxu0 0.0
  %70 = vmatpush1.msra.mxu0 0.0
  %71 = vmatprep.subr.mxu0 0.0
  %72 = vmatpush1.msra.mxu0 0.0
  %73 = vmatprep.subr.mxu0 0.0
  %74 = vmatpush1.msra.mxu0 0.0
  %75 = vmatprep.subr.mxu0 0.0
  %76 = vmatpush1.msra.mxu0 0.0
  %77 = vmatprep.subr.mxu0 0.0
  %78 = vmatpush1.msra.mxu0 0.0
  %79 = vmatprep.subr.mxu0 0.0
  %80 = vmatpush1.msra.mxu0 0.0
  %81 = vmatprep.subr.mxu0 0.0
  %82 = vmatpush1.msra.mxu0 0.0
  %83 = vmatprep.subr.mxu0 0.0
  %84 = vmatpush1.msra.mxu0 0.0
  %85 = vmatprep.subr.mxu0 0.0
  %86 = vmatpush1.msra.mxu0 0.0
  %87 = vmatprep.subr.mxu0 0.0
  %88 = vmatpush1.msra.mxu0 0.0
  %89 = vmatprep.subr.mxu0 0.0
  %90 = vmatpush1.msra.mxu0 0.0
  %91 = vmatprep.subr.mxu0 0.0
  %92 = vmatpush1.msra.mxu0 0.0
  %93 = vmatprep.subr.mxu0 0.0
  %94 = vmatpush1.msra.mxu0 0.0
  %95 = vmatprep.subr.mxu0 0.0
  %96 = vmatpush1.msra.mxu0 0.0
  %97 = vmatprep.subr.mxu0 0.0
  %98 = vmatpush1.msra.mxu0 0.0
  %99 = vmatprep.subr.mxu0 0.0
  %100 = vmatpush1.msra.mxu0 0.0
  %101 = vmatprep.subr.mxu0 0.0
  %102 = vmatpush1.msra.mxu0 0.0
  %103 = vmatprep.subr.mxu0 0.0
  %104 = vmatpush1.msra.mxu0 0.0
  %105 = vmatprep.subr.mxu0 0.0
  %106 = vmatpush1.msra.mxu0 0.0
  %107 = vmatprep.mubr.f32.mxu0 0.0
  %108 = vmatmul.mubr.f32.gmra.mrb[0].mxu0 %v41
  %v109 = vpop.f32.mrb[0].mxu0
  %v110 = vadd.f32 0.0, %v109
  %v111 = vpop.f32.mrb[0].mxu0
  %112 = vdwg.mxu0
  %v113 = vadd.f32 %v25, %v110
  %v114 = vxor.u32 %v113, 2147483648
  %v115 = vmul.f32 %v114, 1.442695
  %v116 = vpow.pop %v115
  %v117 = vadd.f32 %v116, 1.0
  %v118 = vrcp.pop %v117
  %v119 = vmul.f32 1.0, %v118
  %121 = vrot.lane.b32.xlu0 %v37, 64
  %v122 = vpop.permute.xlu0 %121
  %v124 = vadd.f32 %v110, %v122
  %126 = vrot.lane.b32.xlu0 %v124, 64
  %v127 = vpop.permute.xlu0 %126
  %v129 = vmul.f32 %v119, %v127
  %131 = vrot.lane.b32.xlu0 %v129, 64
  %v132 = vpop.permute.xlu0 %131
  %v134 = vadd.f32 %v25, %v132
  %v135 = vtanh.pop %v134
  %v136 = vsub.f32 1.0, %v119
  %138 = vrot.lane.b32.xlu0 %v135, 96
  %v139 = vpop.permute.xlu0 %138
  %v141 = vmul.f32 %v136, %v139
  %142 = vrot.lane.b32.xlu0 %v38, 32
  %v143 = vpop.permute.xlu0 %142
  %v145 = vmul.f32 %v119, %v143
  %v146 = vadd.f32 %v141, %v145
  %148 = vrot.lane.b32.xlu0 %v146, 96
  %v149 = vpop.permute.xlu0 %148
  %v150 = vsel %vm39, %v149, 0
  %152 = vmatprep.subr.mxu0 0.0
  %153 = vmatpush1.msra.mxu0 %v33
  %154 = vmatprep.subr.mxu0 0.0
  %155 = vmatpush1.msra.mxu0 %v34
  %156 = vmatprep.subr.mxu0 0.0
  %157 = vmatpush1.msra.mxu0 %v35
  %158 = vmatprep.subr.mxu0 0.0
  %159 = vmatpush1.msra.mxu0 %v36
  %160 = vmatprep.subr.mxu0 0.0
  %161 = vmatpush1.msra.mxu0 0.0
  %162 = vmatprep.subr.mxu0 0.0
  %163 = vmatpush1.msra.mxu0 0.0
  %164 = vmatprep.subr.mxu0 0.0
  %165 = vmatpush1.msra.mxu0 0.0
  %166 = vmatprep.subr.mxu0 0.0
  %167 = vmatpush1.msra.mxu0 0.0
  %168 = vmatprep.subr.mxu0 0.0
  %169 = vmatpush1.msra.mxu0 0.0
  %170 = vmatprep.subr.mxu0 0.0
  %171 = vmatpush1.msra.mxu0 0.0
  %172 = vmatprep.subr.mxu0 0.0
  %173 = vmatpush1.msra.mxu0 0.0
  %174 = vmatprep.subr.mxu0 0.0
  %175 = vmatpush1.msra.mxu0 0.0
  %176 = vmatprep.subr.mxu0 0.0
  %177 = vmatpush1.msra.mxu0 0.0
  %178 = vmatprep.subr.mxu0 0.0
  %179 = vmatpush1.msra.mxu0 0.0
  %180 = vmatprep.subr.mxu0 0.0
  %181 = vmatpush1.msra.mxu0 0.0
  %182 = vmatprep.subr.mxu0 0.0
  %183 = vmatpush1.msra.mxu0 0.0
  %184 = vmatprep.subr.mxu0 0.0
  %185 = vmatpush1.msra.mxu0 0.0
  %186 = vmatprep.subr.mxu0 0.0
  %187 = vmatpush1.msra.mxu0 0.0
  %188 = vmatprep.subr.mxu0 0.0
  %189 = vmatpush1.msra.mxu0 0.0
  %190 = vmatprep.subr.mxu0 0.0
  %191 = vmatpush1.msra.mxu0 0.0
  %192 = vmatprep.subr.mxu0 0.0
  %193 = vmatpush1.msra.mxu0 0.0
  %194 = vmatprep.subr.mxu0 0.0
  %195 = vmatpush1.msra.mxu0 0.0
  %196 = vmatprep.subr.mxu0 0.0
  %197 = vmatpush1.msra.mxu0 0.0
  %198 = vmatprep.subr.mxu0 0.0
  %199 = vmatpush1.msra.mxu0 0.0
  %200 = vmatprep.subr.mxu0 0.0
  %201 = vmatpush1.msra.mxu0 0.0
  %202 = vmatprep.subr.mxu0 0.0
  %203 = vmatpush1.msra.mxu0 0.0
  %204 = vmatprep.subr.mxu0 0.0
  %205 = vmatpush1.msra.mxu0 0.0
  %206 = vmatprep.subr.mxu0 0.0
  %207 = vmatpush1.msra.mxu0 0.0
  %208 = vmatprep.subr.mxu0 0.0
  %209 = vmatpush1.msra.mxu0 0.0
  %210 = vmatprep.subr.mxu0 0.0
  %211 = vmatpush1.msra.mxu0 0.0
  %212 = vmatprep.subr.mxu0 0.0
  %213 = vmatpush1.msra.mxu0 0.0
  %214 = vmatprep.subr.mxu0 0.0
  %215 = vmatpush1.msra.mxu0 0.0
  %216 = vmatprep.mubr.f32.mxu0 0.0
  %217 = vmatmul.mubr.f32.gmra.mrb[0].mxu0 %v150
  %v218 = vpop.f32.mrb[0].mxu0
  %v219 = vadd.f32 0.0, %v218
  %v220 = vpop.f32.mrb[0].mxu0
  %221 = vdwg.mxu0
  %v222 = vadd.f32 %v26, %v219
  %v223 = vxor.u32 %v222, 2147483648
  %v224 = vmul.f32 %v223, 1.442695
  %v225 = vpow.pop %v224
  %v226 = vadd.f32 %v225, 1.0
  %v227 = vrcp.pop %v226
  %v228 = vmul.f32 1.0, %v227
  %v229 = vadd.f32 %v219, %v122
  %231 = vrot.lane.b32.xlu0 %v229, 64
  %v232 = vpop.permute.xlu0 %231
  %v234 = vmul.f32 %v228, %v232
  %236 = vrot.lane.b32.xlu0 %v234, 64
  %v237 = vpop.permute.xlu0 %236
  %v239 = vadd.f32 %v26, %v237
  %v240 = vtanh.pop %v239
  %v241 = vsub.f32 1.0, %v228
  %243 = vrot.lane.b32.xlu0 %v240, 96
  %v244 = vpop.permute.xlu0 %243
  %v246 = vmul.f32 %v241, %v244
  %v247 = vmul.f32 %v228, %v146
  %v248 = vadd.f32 %v246, %v247
  %250 = vrot.lane.b32.xlu0 %v248, 96
  %v251 = vpop.permute.xlu0 %250
  %v252 = vsel %vm39, %v251, 0
  %254 = vmatprep.subr.mxu0 0.0
  %255 = vmatpush1.msra.mxu0 %v33
  %256 = vmatprep.subr.mxu0 0.0
  %257 = vmatpush1.msra.mxu0 %v34
  %258 = vmatprep.subr.mxu0 0.0
  %259 = vmatpush1.msra.mxu0 %v35
  %260 = vmatprep.subr.mxu0 0.0
  %261 = vmatpush1.msra.mxu0 %v36
  %262 = vmatprep.subr.mxu0 0.0
  %263 = vmatpush1.msra.mxu0 0.0
  %264 = vmatprep.subr.mxu0 0.0
  %265 = vmatpush1.msra.mxu0 0.0
  %266 = vmatprep.subr.mxu0 0.0
  %267 = vmatpush1.msra.mxu0 0.0
  %268 = vmatprep.subr.mxu0 0.0
  %269 = vmatpush1.msra.mxu0 0.0
  %270 = vmatprep.subr.mxu0 0.0
  %271 = vmatpush1.msra.mxu0 0.0
  %272 = vmatprep.subr.mxu0 0.0
  %273 = vmatpush1.msra.mxu0 0.0
  %274 = vmatprep.subr.mxu0 0.0
  %275 = vmatpush1.msra.mxu0 0.0
  %276 = vmatprep.subr.mxu0 0.0
  %277 = vmatpush1.msra.mxu0 0.0
  %278 = vmatprep.subr.mxu0 0.0
  %279 = vmatpush1.msra.mxu0 0.0
  %280 = vmatprep.subr.mxu0 0.0
  %281 = vmatpush1.msra.mxu0 0.0
  %282 = vmatprep.subr.mxu0 0.0
  %283 = vmatpush1.msra.mxu0 0.0
  %284 = vmatprep.subr.mxu0 0.0
  %285 = vmatpush1.msra.mxu0 0.0
  %286 = vmatprep.subr.mxu0 0.0
  %287 = vmatpush1.msra.mxu0 0.0
  %288 = vmatprep.subr.mxu0 0.0
  %289 = vmatpush1.msra.mxu0 0.0
  %290 = vmatprep.subr.mxu0 0.0
  %291 = vmatpush1.msra.mxu0 0.0
  %292 = vmatprep.subr.mxu0 0.0
  %293 = vmatpush1.msra.mxu0 0.0
  %294 = vmatprep.subr.mxu0 0.0
  %295 = vmatpush1.msra.mxu0 0.0
  %296 = vmatprep.subr.mxu0 0.0
  %297 = vmatpush1.msra.mxu0 0.0
  %298 = vmatprep.subr.mxu0 0.0
  %299 = vmatpush1.msra.mxu0 0.0
  %300 = vmatprep.subr.mxu0 0.0
  %301 = vmatpush1.msra.mxu0 0.0
  %302 = vmatprep.subr.mxu0 0.0
  %303 = vmatpush1.msra.mxu0 0.0
  %304 = vmatprep.subr.mxu0 0.0
  %305 = vmatpush1.msra.mxu0 0.0
  %306 = vmatprep.subr.mxu0 0.0
  %307 = vmatpush1.msra.mxu0 0.0
  %308 = vmatprep.subr.mxu0 0.0
  %309 = vmatpush1.msra.mxu0 0.0
  %310 = vmatprep.subr.mxu0 0.0
  %311 = vmatpush1.msra.mxu0 0.0
  %312 = vmatprep.subr.mxu0 0.0
  %313 = vmatpush1.msra.mxu0 0.0
  %314 = vmatprep.subr.mxu0 0.0
  %315 = vmatpush1.msra.mxu0 0.0
  %316 = vmatprep.subr.mxu0 0.0
  %317 = vmatpush1.msra.mxu0 0.0
  %318 = vmatprep.mubr.f32.mxu0 0.0
  %319 = vmatmul.mubr.f32.gmra.mrb[0].mxu0 %v252
  %v320 = vpop.f32.mrb[0].mxu0
  %v321 = vadd.f32 0.0, %v320
  %v322 = vpop.f32.mrb[0].mxu0
  %323 = vdwg.mxu0
  %v324 = vadd.f32 %v27, %v321
  %v325 = vxor.u32 %v324, 2147483648
  %v326 = vmul.f32 %v325, 1.442695
  %v327 = vpow.pop %v326
  %v328 = vadd.f32 %v327, 1.0
  %v329 = vrcp.pop %v328
  %v330 = vmul.f32 1.0, %v329
  %v331 = vadd.f32 %v321, %v122
  %333 = vrot.lane.b32.xlu0 %v331, 64
  %v334 = vpop.permute.xlu0 %333
  %v336 = vmul.f32 %v330, %v334
  %338 = vrot.lane.b32.xlu0 %v336, 64
  %v339 = vpop.permute.xlu0 %338
  %v341 = vadd.f32 %v27, %v339
  %v342 = vtanh.pop %v341
  %v343 = vsub.f32 1.0, %v330
  %345 = vrot.lane.b32.xlu0 %v342, 96
  %v346 = vpop.permute.xlu0 %345
  %v348 = vmul.f32 %v343, %v346
  %v349 = vmul.f32 %v330, %v248
  %v350 = vadd.f32 %v348, %v349
  %352 = vrot.lane.b32.xlu0 %v350, 96
  %v353 = vpop.permute.xlu0 %352
  %v354 = vsel %vm39, %v353, 0
  %356 = vmatprep.subr.mxu0 0.0
  %357 = vmatpush1.msra.mxu0 %v33
  %358 = vmatprep.subr.mxu0 0.0
  %359 = vmatpush1.msra.mxu0 %v34
  %360 = vmatprep.subr.mxu0 0.0
  %361 = vmatpush1.msra.mxu0 %v35
  %362 = vmatprep.subr.mxu0 0.0
  %363 = vmatpush1.msra.mxu0 %v36
  %364 = vmatprep.subr.mxu0 0.0
  %365 = vmatpush1.msra.mxu0 0.0
  %366 = vmatprep.subr.mxu0 0.0
  %367 = vmatpush1.msra.mxu0 0.0
  %368 = vmatprep.subr.mxu0 0.0
  %369 = vmatpush1.msra.mxu0 0.0
  %370 = vmatprep.subr.mxu0 0.0
  %371 = vmatpush1.msra.mxu0 0.0
  %372 = vmatprep.subr.mxu0 0.0
  %373 = vmatpush1.msra.mxu0 0.0
  %374 = vmatprep.subr.mxu0 0.0
  %375 = vmatpush1.msra.mxu0 0.0
  %376 = vmatprep.subr.mxu0 0.0
  %377 = vmatpush1.msra.mxu0 0.0
  %378 = vmatprep.subr.mxu0 0.0
  %379 = vmatpush1.msra.mxu0 0.0
  %380 = vmatprep.subr.mxu0 0.0
  %381 = vmatpush1.msra.mxu0 0.0
  %382 = vmatprep.subr.mxu0 0.0
  %383 = vmatpush1.msra.mxu0 0.0
  %384 = vmatprep.subr.mxu0 0.0
  %385 = vmatpush1.msra.mxu0 0.0
  %386 = vmatprep.subr.mxu0 0.0
  %387 = vmatpush1.msra.mxu0 0.0
  %388 = vmatprep.subr.mxu0 0.0
  %389 = vmatpush1.msra.mxu0 0.0
  %390 = vmatprep.subr.mxu0 0.0
  %391 = vmatpush1.msra.mxu0 0.0
  %392 = vmatprep.subr.mxu0 0.0
  %393 = vmatpush1.msra.mxu0 0.0
  %394 = vmatprep.subr.mxu0 0.0
  %395 = vmatpush1.msra.mxu0 0.0
  %396 = vmatprep.subr.mxu0 0.0
  %397 = vmatpush1.msra.mxu0 0.0
  %398 = vmatprep.subr.mxu0 0.0
  %399 = vmatpush1.msra.mxu0 0.0
  %400 = vmatprep.subr.mxu0 0.0
  %401 = vmatpush1.msra.mxu0 0.0
  %402 = vmatprep.subr.mxu0 0.0
  %403 = vmatpush1.msra.mxu0 0.0
  %404 = vmatprep.subr.mxu0 0.0
  %405 = vmatpush1.msra.mxu0 0.0
  %406 = vmatprep.subr.mxu0 0.0
  %407 = vmatpush1.msra.mxu0 0.0
  %408 = vmatprep.subr.mxu0 0.0
  %409 = vmatpush1.msra.mxu0 0.0
  %410 = vmatprep.subr.mxu0 0.0
  %411 = vmatpush1.msra.mxu0 0.0
  %412 = vmatprep.subr.mxu0 0.0
  %413 = vmatpush1.msra.mxu0 0.0
  %414 = vmatprep.subr.mxu0 0.0
  %415 = vmatpush1.msra.mxu0 0.0
  %416 = vmatprep.subr.mxu0 0.0
  %417 = vmatpush1.msra.mxu0 0.0
  %418 = vmatprep.subr.mxu0 0.0
  %419 = vmatpush1.msra.mxu0 0.0
  %420 = vmatprep.mubr.f32.mxu0 0.0
  %421 = vmatmul.mubr.f32.gmra.mrb[0].mxu0 %v354
  %v422 = vpop.f32.mrb[0].mxu0
  %v423 = vadd.f32 0.0, %v422
  %v424 = vpop.f32.mrb[0].mxu0
  %425 = vdwg.mxu0
  %v426 = vadd.f32 %v28, %v423
  %v427 = vxor.u32 %v426, 2147483648
  %v428 = vmul.f32 %v427, 1.442695
  %v429 = vpow.pop %v428
  %v430 = vadd.f32 %v429, 1.0
  %v431 = vrcp.pop %v430
  %v432 = vmul.f32 1.0, %v431
  %v433 = vadd.f32 %v423, %v122
  %435 = vrot.lane.b32.xlu0 %v433, 64
  %v436 = vpop.permute.xlu0 %435
  %v438 = vmul.f32 %v432, %v436
  %440 = vrot.lane.b32.xlu0 %v438, 64
  %v441 = vpop.permute.xlu0 %440
  %v443 = vadd.f32 %v28, %v441
  %v444 = vtanh.pop %v443
  %v445 = vsub.f32 1.0, %v432
  %447 = vrot.lane.b32.xlu0 %v444, 96
  %v448 = vpop.permute.xlu0 %447
  %v450 = vmul.f32 %v445, %v448
  %v451 = vmul.f32 %v432, %v350
  %v452 = vadd.f32 %v450, %v451
  %454 = vrot.lane.b32.xlu0 %v452, 96
  %v455 = vpop.permute.xlu0 %454
  %v456 = vsel %vm39, %v455, 0
  %458 = vmatprep.subr.mxu0 0.0
  %459 = vmatpush1.msra.mxu0 %v33
  %460 = vmatprep.subr.mxu0 0.0
  %461 = vmatpush1.msra.mxu0 %v34
  %462 = vmatprep.subr.mxu0 0.0
  %463 = vmatpush1.msra.mxu0 %v35
  %464 = vmatprep.subr.mxu0 0.0
  %465 = vmatpush1.msra.mxu0 %v36
  %466 = vmatprep.subr.mxu0 0.0
  %467 = vmatpush1.msra.mxu0 0.0
  %468 = vmatprep.subr.mxu0 0.0
  %469 = vmatpush1.msra.mxu0 0.0
  %470 = vmatprep.subr.mxu0 0.0
  %471 = vmatpush1.msra.mxu0 0.0
  %472 = vmatprep.subr.mxu0 0.0
  %473 = vmatpush1.msra.mxu0 0.0
  %474 = vmatprep.subr.mxu0 0.0
  %475 = vmatpush1.msra.mxu0 0.0
  %476 = vmatprep.subr.mxu0 0.0
  %477 = vmatpush1.msra.mxu0 0.0
  %478 = vmatprep.subr.mxu0 0.0
  %479 = vmatpush1.msra.mxu0 0.0
  %480 = vmatprep.subr.mxu0 0.0
  %481 = vmatpush1.msra.mxu0 0.0
  %482 = vmatprep.subr.mxu0 0.0
  %483 = vmatpush1.msra.mxu0 0.0
  %484 = vmatprep.subr.mxu0 0.0
  %485 = vmatpush1.msra.mxu0 0.0
  %486 = vmatprep.subr.mxu0 0.0
  %487 = vmatpush1.msra.mxu0 0.0
  %488 = vmatprep.subr.mxu0 0.0
  %489 = vmatpush1.msra.mxu0 0.0
  %490 = vmatprep.subr.mxu0 0.0
  %491 = vmatpush1.msra.mxu0 0.0
  %492 = vmatprep.subr.mxu0 0.0
  %493 = vmatpush1.msra.mxu0 0.0
  %494 = vmatprep.subr.mxu0 0.0
  %495 = vmatpush1.msra.mxu0 0.0
  %496 = vmatprep.subr.mxu0 0.0
  %497 = vmatpush1.msra.mxu0 0.0
  %498 = vmatprep.subr.mxu0 0.0
  %499 = vmatpush1.msra.mxu0 0.0
  %500 = vmatprep.subr.mxu0 0.0
  %501 = vmatpush1.msra.mxu0 0.0
  %502 = vmatprep.subr.mxu0 0.0
  %503 = vmatpush1.msra.mxu0 0.0
  %504 = vmatprep.subr.mxu0 0.0
  %505 = vmatpush1.msra.mxu0 0.0
  %506 = vmatprep.subr.mxu0 0.0
  %507 = vmatpush1.msra.mxu0 0.0
  %508 = vmatprep.subr.mxu0 0.0
  %509 = vmatpush1.msra.mxu0 0.0
  %510 = vmatprep.subr.mxu0 0.0
  %511 = vmatpush1.msra.mxu0 0.0
  %512 = vmatprep.subr.mxu0 0.0
  %513 = vmatpush1.msra.mxu0 0.0
  %514 = vmatprep.subr.mxu0 0.0
  %515 = vmatpush1.msra.mxu0 0.0
  %516 = vmatprep.subr.mxu0 0.0
  %517 = vmatpush1.msra.mxu0 0.0
  %518 = vmatprep.subr.mxu0 0.0
  %519 = vmatpush1.msra.mxu0 0.0
  %520 = vmatprep.subr.mxu0 0.0
  %521 = vmatpush1.msra.mxu0 0.0
  %522 = vmatprep.mubr.f32.mxu0 0.0
  %523 = vmatmul.mubr.f32.gmra.mrb[0].mxu0 %v456
  %v524 = vpop.f32.mrb[0].mxu0
  %v525 = vadd.f32 0.0, %v524
  %v526 = vpop.f32.mrb[0].mxu0
  %527 = vdwg.mxu0
  %v528 = vadd.f32 %v29, %v525
  %v529 = vxor.u32 %v528, 2147483648
  %v530 = vmul.f32 %v529, 1.442695
  %v531 = vpow.pop %v530
  %v532 = vadd.f32 %v531, 1.0
  %v533 = vrcp.pop %v532
  %v534 = vmul.f32 1.0, %v533
  %v535 = vadd.f32 %v525, %v122
  %537 = vrot.lane.b32.xlu0 %v535, 64
  %v538 = vpop.permute.xlu0 %537
  %v540 = vmul.f32 %v534, %v538
  %542 = vrot.lane.b32.xlu0 %v540, 64
  %v543 = vpop.permute.xlu0 %542
  %v545 = vadd.f32 %v29, %v543
  %v546 = vtanh.pop %v545
  %v547 = vsub.f32 1.0, %v534
  %549 = vrot.lane.b32.xlu0 %v546, 96
  %v550 = vpop.permute.xlu0 %549
  %v552 = vmul.f32 %v547, %v550
  %v553 = vmul.f32 %v534, %v452
  %v554 = vadd.f32 %v552, %v553
  %556 = vrot.lane.b32.xlu0 %v554, 96
  %v557 = vpop.permute.xlu0 %556
  %v558 = vsel %vm39, %v557, 0
  %560 = vmatprep.subr.mxu0 0.0
  %561 = vmatpush1.msra.mxu0 %v33
  %562 = vmatprep.subr.mxu0 0.0
  %563 = vmatpush1.msra.mxu0 %v34
  %564 = vmatprep.subr.mxu0 0.0
  %565 = vmatpush1.msra.mxu0 %v35
  %566 = vmatprep.subr.mxu0 0.0
  %567 = vmatpush1.msra.mxu0 %v36
  %568 = vmatprep.subr.mxu0 0.0
  %569 = vmatpush1.msra.mxu0 0.0
  %570 = vmatprep.subr.mxu0 0.0
  %571 = vmatpush1.msra.mxu0 0.0
  %572 = vmatprep.subr.mxu0 0.0
  %573 = vmatpush1.msra.mxu0 0.0
  %574 = vmatprep.subr.mxu0 0.0
  %575 = vmatpush1.msra.mxu0 0.0
  %576 = vmatprep.subr.mxu0 0.0
  %577 = vmatpush1.msra.mxu0 0.0
  %578 = vmatprep.subr.mxu0 0.0
  %579 = vmatpush1.msra.mxu0 0.0
  %580 = vmatprep.subr.mxu0 0.0
  %581 = vmatpush1.msra.mxu0 0.0
  %582 = vmatprep.subr.mxu0 0.0
  %583 = vmatpush1.msra.mxu0 0.0
  %584 = vmatprep.subr.mxu0 0.0
  %585 = vmatpush1.msra.mxu0 0.0
  %586 = vmatprep.subr.mxu0 0.0
  %587 = vmatpush1.msra.mxu0 0.0
  %588 = vmatprep.subr.mxu0 0.0
  %589 = vmatpush1.msra.mxu0 0.0
  %590 = vmatprep.subr.mxu0 0.0
  %591 = vmatpush1.msra.mxu0 0.0
  %592 = vmatprep.subr.mxu0 0.0
  %593 = vmatpush1.msra.mxu0 0.0
  %594 = vmatprep.subr.mxu0 0.0
  %595 = vmatpush1.msra.mxu0 0.0
  %596 = vmatprep.subr.mxu0 0.0
  %597 = vmatpush1.msra.mxu0 0.0
  %598 = vmatprep.subr.mxu0 0.0
  %599 = vmatpush1.msra.mxu0 0.0
  %600 = vmatprep.subr.mxu0 0.0
  %601 = vmatpush1.msra.mxu0 0.0
  %602 = vmatprep.subr.mxu0 0.0
  %603 = vmatpush1.msra.mxu0 0.0
  %604 = vmatprep.subr.mxu0 0.0
  %605 = vmatpush1.msra.mxu0 0.0
  %606 = vmatprep.subr.mxu0 0.0
  %607 = vmatpush1.msra.mxu0 0.0
  %608 = vmatprep.subr.mxu0 0.0
  %609 = vmatpush1.msra.mxu0 0.0
  %610 = vmatprep.subr.mxu0 0.0
  %611 = vmatpush1.msra.mxu0 0.0
  %612 = vmatprep.subr.mxu0 0.0
  %613 = vmatpush1.msra.mxu0 0.0
  %614 = vmatprep.subr.mxu0 0.0
  %615 = vmatpush1.msra.mxu0 0.0
  %616 = vmatprep.subr.mxu0 0.0
  %617 = vmatpush1.msra.mxu0 0.0
  %618 = vmatprep.subr.mxu0 0.0
  %619 = vmatpush1.msra.mxu0 0.0
  %620 = vmatprep.subr.mxu0 0.0
  %621 = vmatpush1.msra.mxu0 0.0
  %622 = vmatprep.subr.mxu0 0.0
  %623 = vmatpush1.msra.mxu0 0.0
  %624 = vmatprep.mubr.f32.mxu0 0.0
  %625 = vmatmul.mubr.f32.gmra.mrb[0].mxu0 %v558
  %v626 = vpop.f32.mrb[0].mxu0
  %v627 = vadd.f32 0.0, %v626
  %v628 = vpop.f32.mrb[0].mxu0
  %629 = vdwg.mxu0
  %v630 = vadd.f32 %v30, %v627
  %v631 = vxor.u32 %v630, 2147483648
  %v632 = vmul.f32 %v631, 1.442695
  %v633 = vpow.pop %v632
  %v634 = vadd.f32 %v633, 1.0
  %v635 = vrcp.pop %v634
  %v636 = vmul.f32 1.0, %v635
  %v637 = vadd.f32 %v627, %v122
  %639 = vrot.lane.b32.xlu0 %v637, 64
  %v640 = vpop.permute.xlu0 %639
  %v642 = vmul.f32 %v636, %v640
  %644 = vrot.lane.b32.xlu0 %v642, 64
  %v645 = vpop.permute.xlu0 %644
  %v647 = vadd.f32 %v30, %v645
  %v648 = vtanh.pop %v647
  %v649 = vsub.f32 1.0, %v636
  %651 = vrot.lane.b32.xlu0 %v648, 96
  %v652 = vpop.permute.xlu0 %651
  %v654 = vmul.f32 %v649, %v652
  %v655 = vmul.f32 %v636, %v554
  %v656 = vadd.f32 %v654, %v655
  %658 = vrot.lane.b32.xlu0 %v656, 96
  %v659 = vpop.permute.xlu0 %658
  %v660 = vsel %vm39, %v659, 0
  %662 = vmatprep.subr.mxu0 0.0
  %663 = vmatpush1.msra.mxu0 %v33
  %664 = vmatprep.subr.mxu0 0.0
  %665 = vmatpush1.msra.mxu0 %v34
  %666 = vmatprep.subr.mxu0 0.0
  %667 = vmatpush1.msra.mxu0 %v35
  %668 = vmatprep.subr.mxu0 0.0
  %669 = vmatpush1.msra.mxu0 %v36
  %670 = vmatprep.subr.mxu0 0.0
  %671 = vmatpush1.msra.mxu0 0.0
  %672 = vmatprep.subr.mxu0 0.0
  %673 = vmatpush1.msra.mxu0 0.0
  %674 = vmatprep.subr.mxu0 0.0
  %675 = vmatpush1.msra.mxu0 0.0
  %676 = vmatprep.subr.mxu0 0.0
  %677 = vmatpush1.msra.mxu0 0.0
  %678 = vmatprep.subr.mxu0 0.0
  %679 = vmatpush1.msra.mxu0 0.0
  %680 = vmatprep.subr.mxu0 0.0
  %681 = vmatpush1.msra.mxu0 0.0
  %682 = vmatprep.subr.mxu0 0.0
  %683 = vmatpush1.msra.mxu0 0.0
  %684 = vmatprep.subr.mxu0 0.0
  %685 = vmatpush1.msra.mxu0 0.0
  %686 = vmatprep.subr.mxu0 0.0
  %687 = vmatpush1.msra.mxu0 0.0
  %688 = vmatprep.subr.mxu0 0.0
  %689 = vmatpush1.msra.mxu0 0.0
  %690 = vmatprep.subr.mxu0 0.0
  %691 = vmatpush1.msra.mxu0 0.0
  %692 = vmatprep.subr.mxu0 0.0
  %693 = vmatpush1.msra.mxu0 0.0
  %694 = vmatprep.subr.mxu0 0.0
  %695 = vmatpush1.msra.mxu0 0.0
  %696 = vmatprep.subr.mxu0 0.0
  %697 = vmatpush1.msra.mxu0 0.0
  %698 = vmatprep.subr.mxu0 0.0
  %699 = vmatpush1.msra.mxu0 0.0
  %700 = vmatprep.subr.mxu0 0.0
  %701 = vmatpush1.msra.mxu0 0.0
  %702 = vmatprep.subr.mxu0 0.0
  %703 = vmatpush1.msra.mxu0 0.0
  %704 = vmatprep.subr.mxu0 0.0
  %705 = vmatpush1.msra.mxu0 0.0
  %706 = vmatprep.subr.mxu0 0.0
  %707 = vmatpush1.msra.mxu0 0.0
  %708 = vmatprep.subr.mxu0 0.0
  %709 = vmatpush1.msra.mxu0 0.0
  %710 = vmatprep.subr.mxu0 0.0
  %711 = vmatpush1.msra.mxu0 0.0
  %712 = vmatprep.subr.mxu0 0.0
  %713 = vmatpush1.msra.mxu0 0.0
  %714 = vmatprep.subr.mxu0 0.0
  %715 = vmatpush1.msra.mxu0 0.0
  %716 = vmatprep.subr.mxu0 0.0
  %717 = vmatpush1.msra.mxu0 0.0
  %718 = vmatprep.subr.mxu0 0.0
  %719 = vmatpush1.msra.mxu0 0.0
  %720 = vmatprep.subr.mxu0 0.0
  %721 = vmatpush1.msra.mxu0 0.0
  %722 = vmatprep.subr.mxu0 0.0
  %723 = vmatpush1.msra.mxu0 0.0
  %724 = vmatprep.subr.mxu0 0.0
  %725 = vmatpush1.msra.mxu0 0.0
  %726 = vmatprep.mubr.f32.mxu0 0.0
  %727 = vmatmul.mubr.f32.gmra.mrb[0].mxu0 %v660
  %v728 = vpop.f32.mrb[0].mxu0
  %v729 = vadd.f32 0.0, %v728
  %v730 = vpop.f32.mrb[0].mxu0
  %731 = vdwg.mxu0
  %v732 = vadd.f32 %v31, %v729
  %v733 = vxor.u32 %v732, 2147483648
  %v734 = vmul.f32 %v733, 1.442695
  %v735 = vpow.pop %v734
  %v736 = vadd.f32 %v735, 1.0
  %v737 = vrcp.pop %v736
  %v738 = vmul.f32 1.0, %v737
  %v739 = vadd.f32 %v729, %v122
  %741 = vrot.lane.b32.xlu0 %v739, 64
  %v742 = vpop.permute.xlu0 %741
  %v744 = vmul.f32 %v738, %v742
  %746 = vrot.lane.b32.xlu0 %v744, 64
  %v747 = vpop.permute.xlu0 %746
  %v749 = vadd.f32 %v31, %v747
  %v750 = vtanh.pop %v749
  %v751 = vsub.f32 1.0, %v738
  %753 = vrot.lane.b32.xlu0 %v750, 96
  %v754 = vpop.permute.xlu0 %753
  %v756 = vmul.f32 %v751, %v754
  %v757 = vmul.f32 %v738, %v656
  %v758 = vadd.f32 %v756, %v757
  %760 = vrot.lane.b32.xlu0 %v758, 96
  %v761 = vpop.permute.xlu0 %760
  %v762 = vsel %vm39, %v761, 0
  %764 = vmatprep.subr.mxu0 0.0
  %765 = vmatpush1.msra.mxu0 %v33
  %766 = vmatprep.subr.mxu0 0.0
  %767 = vmatpush1.msra.mxu0 %v34
  %768 = vmatprep.subr.mxu0 0.0
  %769 = vmatpush1.msra.mxu0 %v35
  %770 = vmatprep.subr.mxu0 0.0
  %771 = vmatpush1.msra.mxu0 %v36
  %772 = vmatprep.subr.mxu0 0.0
  %773 = vmatpush1.msra.mxu0 0.0
  %774 = vmatprep.subr.mxu0 0.0
  %775 = vmatpush1.msra.mxu0 0.0
  %776 = vmatprep.subr.mxu0 0.0
  %777 = vmatpush1.msra.mxu0 0.0
  %778 = vmatprep.subr.mxu0 0.0
  %779 = vmatpush1.msra.mxu0 0.0
  %780 = vmatprep.subr.mxu0 0.0
  %781 = vmatpush1.msra.mxu0 0.0
  %782 = vmatprep.subr.mxu0 0.0
  %783 = vmatpush1.msra.mxu0 0.0
  %784 = vmatprep.subr.mxu0 0.0
  %785 = vmatpush1.msra.mxu0 0.0
  %786 = vmatprep.subr.mxu0 0.0
  %787 = vmatpush1.msra.mxu0 0.0
  %788 = vmatprep.subr.mxu0 0.0
  %789 = vmatpush1.msra.mxu0 0.0
  %790 = vmatprep.subr.mxu0 0.0
  %791 = vmatpush1.msra.mxu0 0.0
  %792 = vmatprep.subr.mxu0 0.0
  %793 = vmatpush1.msra.mxu0 0.0
  %794 = vmatprep.subr.mxu0 0.0
  %795 = vmatpush1.msra.mxu0 0.0
  %796 = vmatprep.subr.mxu0 0.0
  %797 = vmatpush1.msra.mxu0 0.0
  %798 = vmatprep.subr.mxu0 0.0
  %799 = vmatpush1.msra.mxu0 0.0
  %800 = vmatprep.subr.mxu0 0.0
  %801 = vmatpush1.msra.mxu0 0.0
  %802 = vmatprep.subr.mxu0 0.0
  %803 = vmatpush1.msra.mxu0 0.0
  %804 = vmatprep.subr.mxu0 0.0
  %805 = vmatpush1.msra.mxu0 0.0
  %806 = vmatprep.subr.mxu0 0.0
  %807 = vmatpush1.msra.mxu0 0.0
  %808 = vmatprep.subr.mxu0 0.0
  %809 = vmatpush1.msra.mxu0 0.0
  %810 = vmatprep.subr.mxu0 0.0
  %811 = vmatpush1.msra.mxu0 0.0
  %812 = vmatprep.subr.mxu0 0.0
  %813 = vmatpush1.msra.mxu0 0.0
  %814 = vmatprep.subr.mxu0 0.0
  %815 = vmatpush1.msra.mxu0 0.0
  %816 = vmatprep.subr.mxu0 0.0
  %817 = vmatpush1.msra.mxu0 0.0
  %818 = vmatprep.subr.mxu0 0.0
  %819 = vmatpush1.msra.mxu0 0.0
  %820 = vmatprep.subr.mxu0 0.0
  %821 = vmatpush1.msra.mxu0 0.0
  %822 = vmatprep.subr.mxu0 0.0
  %823 = vmatpush1.msra.mxu0 0.0
  %824 = vmatprep.subr.mxu0 0.0
  %825 = vmatpush1.msra.mxu0 0.0
  %826 = vmatprep.subr.mxu0 0.0
  %827 = vmatpush1.msra.mxu0 0.0
  %828 = vmatprep.mubr.f32.mxu0 0.0
  %829 = vmatmul.mubr.f32.gmra.mrb[0].mxu0 %v762
  %v830 = vpop.f32.mrb[0].mxu0
  %v831 = vadd.f32 0.0, %v830
  %v832 = vpop.f32.mrb[0].mxu0
  %833 = vdwg.mxu0
  %v834 = vadd.f32 %v32, %v831
  %v835 = vxor.u32 %v834, 2147483648
  %v836 = vmul.f32 %v835, 1.442695
  %v837 = vpow.pop %v836
  %v838 = vadd.f32 %v837, 1.0
  %v839 = vrcp.pop %v838
  %v840 = vmul.f32 1.0, %v839
  %v841 = vadd.f32 %v831, %v122
  %843 = vrot.lane.b32.xlu0 %v841, 64
  %v844 = vpop.permute.xlu0 %843
  %v846 = vmul.f32 %v840, %v844
  %848 = vrot.lane.b32.xlu0 %v846, 64
  %v849 = vpop.permute.xlu0 %848
  %v851 = vadd.f32 %v32, %v849
  %v852 = vtanh.pop %v851
  %v853 = vsub.f32 1.0, %v840
  %855 = vrot.lane.b32.xlu0 %v852, 96
  %v856 = vpop.permute.xlu0 %855
  %v858 = vmul.f32 %v853, %v856
  %v859 = vmul.f32 %v840, %v758
  %v860 = vadd.f32 %v858, %v859
  %862 = vrot.lane.b32.xlu0 %v860, 96
  %v863 = vpop.permute.xlu0 %862
  %865 = vst.msk [vmem:[%s7] sm:$0xff] %vm39, %v863
  %v866 = vld [vmem:[%s4] sm:$0xff]
  %v867 = vld [vmem:[%s4 + $0x8] sm:$0xff]
  %v868 = vld [vmem:[%s4 + $0x10] sm:$0xff]
  %v869 = vld [vmem:[%s4 + $0x18] sm:$0xff]
  %v870 = vld [vmem:[%s5] sm:$0x1]
  %v872 = vlaneseq
  %v873 = vshrl.u32 %v872, 7
  %v874 = vsub.s32 0, %v873
  %v875 = vrot.slane %v870, %v874
  %v877 = vsel %vm39, %v863, 0
  %879 = vmatprep.subr.mxu0 0.0
  %880 = vmatpush1.msra.mxu0 %v866
  %881 = vmatprep.subr.mxu0 0.0
  %882 = vmatpush1.msra.mxu0 %v867
  %883 = vmatprep.subr.mxu0 0.0
  %884 = vmatpush1.msra.mxu0 %v868
  %885 = vmatprep.subr.mxu0 0.0
  %886 = vmatpush1.msra.mxu0 %v869
  %887 = vmatprep.subr.mxu0 0.0
  %888 = vmatpush1.msra.mxu0 0.0
  %889 = vmatprep.subr.mxu0 0.0
  %890 = vmatpush1.msra.mxu0 0.0
  %891 = vmatprep.subr.mxu0 0.0
  %892 = vmatpush1.msra.mxu0 0.0
  %893 = vmatprep.subr.mxu0 0.0
  %894 = vmatpush1.msra.mxu0 0.0
  %895 = vmatprep.subr.mxu0 0.0
  %896 = vmatpush1.msra.mxu0 0.0
  %897 = vmatprep.subr.mxu0 0.0
  %898 = vmatpush1.msra.mxu0 0.0
  %899 = vmatprep.subr.mxu0 0.0
  %900 = vmatpush1.msra.mxu0 0.0
  %901 = vmatprep.subr.mxu0 0.0
  %902 = vmatpush1.msra.mxu0 0.0
  %903 = vmatprep.subr.mxu0 0.0
  %904 = vmatpush1.msra.mxu0 0.0
  %905 = vmatprep.subr.mxu0 0.0
  %906 = vmatpush1.msra.mxu0 0.0
  %907 = vmatprep.subr.mxu0 0.0
  %908 = vmatpush1.msra.mxu0 0.0
  %909 = vmatprep.subr.mxu0 0.0
  %910 = vmatpush1.msra.mxu0 0.0
  %911 = vmatprep.subr.mxu0 0.0
  %912 = vmatpush1.msra.mxu0 0.0
  %913 = vmatprep.subr.mxu0 0.0
  %914 = vmatpush1.msra.mxu0 0.0
  %915 = vmatprep.subr.mxu0 0.0
  %916 = vmatpush1.msra.mxu0 0.0
  %917 = vmatprep.subr.mxu0 0.0
  %918 = vmatpush1.msra.mxu0 0.0
  %919 = vmatprep.subr.mxu0 0.0
  %920 = vmatpush1.msra.mxu0 0.0
  %921 = vmatprep.subr.mxu0 0.0
  %922 = vmatpush1.msra.mxu0 0.0
  %923 = vmatprep.subr.mxu0 0.0
  %924 = vmatpush1.msra.mxu0 0.0
  %925 = vmatprep.subr.mxu0 0.0
  %926 = vmatpush1.msra.mxu0 0.0
  %927 = vmatprep.subr.mxu0 0.0
  %928 = vmatpush1.msra.mxu0 0.0
  %929 = vmatprep.subr.mxu0 0.0
  %930 = vmatpush1.msra.mxu0 0.0
  %931 = vmatprep.subr.mxu0 0.0
  %932 = vmatpush1.msra.mxu0 0.0
  %933 = vmatprep.subr.mxu0 0.0
  %934 = vmatpush1.msra.mxu0 0.0
  %935 = vmatprep.subr.mxu0 0.0
  %936 = vmatpush1.msra.mxu0 0.0
  %937 = vmatprep.subr.mxu0 0.0
  %938 = vmatpush1.msra.mxu0 0.0
  %939 = vmatprep.subr.mxu0 0.0
  %940 = vmatpush1.msra.mxu0 0.0
  %941 = vmatprep.subr.mxu0 0.0
  %942 = vmatpush1.msra.mxu0 0.0
  %943 = vmatprep.mubr.f32.mxu0 0.0
  %944 = vmatmul.mubr.f32.gmra.mrb[0].mxu0 %v150
  %v945 = vpop.f32.mrb[0].mxu0
  %v946 = vadd.f32 %v875, %v945
  %v947 = vpop.f32.mrb[0].mxu0
  %948 = vmatprep.mubr.f32.mxu0 0.0
  %949 = vmatmul.mubr.f32.gmra.mrb[0].mxu0 %v252
  %v950 = vpop.f32.mrb[0].mxu0
  %v951 = vadd.f32 %v875, %v950
  %v952 = vpop.f32.mrb[0].mxu0
  %953 = vmatprep.mubr.f32.mxu0 0.0
  %954 = vmatmul.mubr.f32.gmra.mrb[0].mxu0 %v354
  %v955 = vpop.f32.mrb[0].mxu0
  %v956 = vadd.f32 %v875, %v955
  %v957 = vpop.f32.mrb[0].mxu0
  %958 = vmatprep.mubr.f32.mxu0 0.0
  %959 = vmatmul.mubr.f32.gmra.mrb[0].mxu0 %v456
  %v960 = vpop.f32.mrb[0].mxu0
  %v961 = vadd.f32 %v875, %v960
  %v962 = vpop.f32.mrb[0].mxu0
  %963 = vmatprep.mubr.f32.mxu0 0.0
  %964 = vmatmul.mubr.f32.gmra.mrb[0].mxu0 %v558
  %v965 = vpop.f32.mrb[0].mxu0
  %v966 = vadd.f32 %v875, %v965
  %v967 = vpop.f32.mrb[0].mxu0
  %968 = vmatprep.mubr.f32.mxu0 0.0
  %969 = vmatmul.mubr.f32.gmra.mrb[0].mxu0 %v660
  %v970 = vpop.f32.mrb[0].mxu0
  %v971 = vadd.f32 %v875, %v970
  %v972 = vpop.f32.mrb[0].mxu0
  %973 = vmatprep.mubr.f32.mxu0 0.0
  %974 = vmatmul.mubr.f32.gmra.mrb[0].mxu0 %v762
  %v975 = vpop.f32.mrb[0].mxu0
  %v976 = vadd.f32 %v875, %v975
  %v977 = vpop.f32.mrb[0].mxu0
  %978 = vmatprep.mubr.f32.mxu0 0.0
  %979 = vmatmul.mubr.f32.gmra.mrb[0].mxu0 %v877
  %v980 = vpop.f32.mrb[0].mxu0
  %v981 = vadd.f32 %v875, %v980
  %v982 = vpop.f32.mrb[0].mxu0
  %983 = vdwg.mxu0
  %984 = vmax.xlane.f32.xlu0 %v946
  %v985 = vpop.xlane.xlu0 %984
  %986 = vmax.xlane.f32.xlu0 %v951
  %v987 = vpop.xlane.xlu0 %986
  %988 = vmax.xlane.f32.xlu0 %v956
  %v989 = vpop.xlane.xlu0 %988
  %990 = vmax.xlane.f32.xlu0 %v961
  %v991 = vpop.xlane.xlu0 %990
  %992 = vmax.xlane.f32.xlu0 %v966
  %v993 = vpop.xlane.xlu0 %992
  %994 = vmax.xlane.f32.xlu0 %v971
  %v995 = vpop.xlane.xlu0 %994
  %996 = vmax.xlane.f32.xlu0 %v976
  %v997 = vpop.xlane.xlu0 %996
  %998 = vmax.xlane.f32.xlu0 %v981
  %v999 = vpop.xlane.xlu0 %998
  %v1000 = vsub.f32 %v946, %v985
  %v1001 = vsub.f32 %v951, %v987
  %v1002 = vsub.f32 %v956, %v989
  %v1003 = vsub.f32 %v961, %v991
  %v1004 = vsub.f32 %v966, %v993
  %v1005 = vsub.f32 %v971, %v995
  %v1006 = vsub.f32 %v976, %v997
  %v1007 = vsub.f32 %v981, %v999
  %v1008 = vmul.f32 %v1000, 1.442695
  %v1009 = vpow.pop %v1008
  %v1010 = vmul.f32 %v1001, 1.442695
  %v1011 = vpow.pop %v1010
  %v1012 = vmul.f32 %v1002, 1.442695
  %v1013 = vpow.pop %v1012
  %v1014 = vmul.f32 %v1003, 1.442695
  %v1015 = vpow.pop %v1014
  %v1016 = vmul.f32 %v1004, 1.442695
  %v1017 = vpow.pop %v1016
  %v1018 = vmul.f32 %v1005, 1.442695
  %v1019 = vpow.pop %v1018
  %v1020 = vmul.f32 %v1006, 1.442695
  %v1021 = vpow.pop %v1020
  %v1022 = vmul.f32 %v1007, 1.442695
  %v1023 = vpow.pop %v1022
  %1024 = vadd.xlane.f32.xlu0 %v1009
  %v1025 = vpop.xlane.xlu0 %1024
  %1026 = vadd.xlane.f32.xlu0 %v1011
  %v1027 = vpop.xlane.xlu0 %1026
  %1028 = vadd.xlane.f32.xlu0 %v1013
  %v1029 = vpop.xlane.xlu0 %1028
  %1030 = vadd.xlane.f32.xlu0 %v1015
  %v1031 = vpop.xlane.xlu0 %1030
  %1032 = vadd.xlane.f32.xlu0 %v1017
  %v1033 = vpop.xlane.xlu0 %1032
  %1034 = vadd.xlane.f32.xlu0 %v1019
  %v1035 = vpop.xlane.xlu0 %1034
  %1036 = vadd.xlane.f32.xlu0 %v1021
  %v1037 = vpop.xlane.xlu0 %1036
  %1038 = vadd.xlane.f32.xlu0 %v1023
  %v1039 = vpop.xlane.xlu0 %1038
  %v1040 = vlog2.pop %v1025
  %v1041 = vmul.f32 %v1040, 0.6931472
  %v1042 = vlog2.pop %v1027
  %v1043 = vmul.f32 %v1042, 0.6931472
  %v1044 = vlog2.pop %v1029
  %v1045 = vmul.f32 %v1044, 0.6931472
  %v1046 = vlog2.pop %v1031
  %v1047 = vmul.f32 %v1046, 0.6931472
  %v1048 = vlog2.pop %v1033
  %v1049 = vmul.f32 %v1048, 0.6931472
  %v1050 = vlog2.pop %v1035
  %v1051 = vmul.f32 %v1050, 0.6931472
  %v1052 = vlog2.pop %v1037
  %v1053 = vmul.f32 %v1052, 0.6931472
  %v1054 = vlog2.pop %v1039
  %v1055 = vmul.f32 %v1054, 0.6931472
  %v1056 = vadd.f32 %v1041, %v985
  %v1057 = vadd.f32 %v1043, %v987
  %v1058 = vadd.f32 %v1045, %v989
  %v1059 = vadd.f32 %v1047, %v991
  %v1060 = vadd.f32 %v1049, %v993
  %v1061 = vadd.f32 %v1051, %v995
  %v1062 = vadd.f32 %v1053, %v997
  %v1063 = vadd.f32 %v1055, %v999
  %v1064 = vsub.f32 %v946, %v1056
  %v1065 = vsub.f32 %v951, %v1057
  %v1066 = vsub.f32 %v956, %v1058
  %v1067 = vsub.f32 %v961, %v1059
  %v1068 = vsub.f32 %v966, %v1060
  %v1069 = vsub.f32 %v971, %v1061
  %v1070 = vsub.f32 %v976, %v1062
  %v1071 = vsub.f32 %v981, %v1063
  %1072 = vst [vmem:[%s6] sm:$0xff] %v1064
  %1073 = vst [vmem:[%s6 + $0x8] sm:$0xff] %v1065
  %1074 = vst [vmem:[%s6 + $0x10] sm:$0xff] %v1066
  %1075 = vst [vmem:[%s6 + $0x18] sm:$0xff] %v1067
  %1076 = vst [vmem:[%s6 + $0x20] sm:$0xff] %v1068
  %1077 = vst [vmem:[%s6 + $0x28] sm:$0xff] %v1069
  %1078 = vst [vmem:[%s6 + $0x30] sm:$0xff] %v1070
  %1079 = vst [vmem:[%s6 + $0x38] sm:$0xff] %v1071
  // Predicated region
  $region26: #{forward.1} parent=0 // pred_check
    _
  $region27: #{forward.1} parent=0 // pred_check_branch
    %1081 = sbr.rel (0) target = $region29
  $region28: #{forward.1} parent=0 // pred_region
    _
  $region29: #{forward.1} parent=0 // pred_fallthru
    _
  // Predicated region
  $region30: #{forward.1} parent=0 // pred_check
    _
  $region31: #{forward.1} parent=0 // pred_check_branch
    %1083 = sbr.rel (0) target = $region33
  $region32: #{forward.1} parent=0 // pred_region
    _
  $region33: #{forward.1} parent=0 // pred_fallthru
    _
  // Predicated region
  $region34: #{forward.1} parent=0 // pred_check
    _
  $region35: #{forward.1} parent=0 // pred_check_branch
    %1085 = sbr.rel (0) target = $region37
  $region36: #{forward.1} parent=0 // pred_region
    _
  $region37: #{forward.1} parent=0 // pred_fallthru
    _
  // Predicated region
  $region38: #{forward.1} parent=0 // pred_check
    _
  $region39: #{forward.1} parent=0 // pred_check_branch
    %1087 = sbr.rel (0) target = $region41
  $region40: #{forward.1} parent=0 // pred_region
    _
  $region41: #{forward.1} parent=0 // pred_fallthru
    _

</llo_original>
